<compile_context>
chip_gen: v6e
topology: v6e:2x2x1
jax: 0.10.0
libtpu: 0.0.40
codegen_flags: <defaults>
</compile_context>

<pallas_src>
import functools
import math

import jax
import jax.numpy as jnp
from jax.experimental import pallas as pl
from jax.experimental.pallas import tpu as pltpu


def _layernorm(x, gamma, beta, eps=1e-5):
    mu = jnp.mean(x, axis=-1, keepdims=True)
    var = jnp.mean((x - mu) ** 2, axis=-1, keepdims=True)
    return (x - mu) * jax.lax.rsqrt(var + eps) * gamma + beta


def _sqi_kernel(z_ref, t_ref,
                wqg_ref, bqg_ref,        # [D,2D] bf16, [1,2D] f32  ([Wq | Wg_z+Wg_c], [bq | bg+bo@Wg_c])
                wkv_ref, bkv_ref,        # [D,2D] bf16, [1,2D] f32  ([Wk | Wv], [bk | bv])
                wog_ref, bog_ref,        # [D,2D] bf16, [1,2D] f32  ([Wo | Wo@Wg_c], [bo | 0])
                gln_g_ref, gln_b_ref,    # gate LayerNorm gamma/beta
                nln_g_ref, nln_b_ref,    # output LayerNorm gamma/beta
                out_ref,
                k_sc, v_sc, attn_sc,     # VMEM scratch: K/V cache (bf16), attn pre-proj (f32)
                *, num_heads, head_dim, mxu_dtype, approx_recip):
    Bb, Nq, D = z_ref.shape
    _, Lt, _ = t_ref.shape
    R = Bb * Nq

    # K/V projection of the text block: computed once per batch block (Np is the inner,
    # sequential grid axis) and cached in VMEM scratch for all Np blocks of that batch block.
    @pl.when(pl.program_id(1) == 0)
    def _project_kv():
        t2 = t_ref[...].reshape(Bb * Lt, D)
        kv = jnp.dot(t2.astype(mxu_dtype), wkv_ref[...],
                     preferred_element_type=jnp.float32) + bkv_ref[...]
        k_sc[...] = kv[:, :D].reshape(Bb, Lt, D).astype(k_sc.dtype)
        v_sc[...] = kv[:, D:].reshape(Bb, Lt, D).astype(v_sc.dtype)

    # Flatten the batch block for all dense / row-wise math (leading-dim fold only; the
    # wrapper guarantees Nq % 8 == 0 and Lt % 8 == 0 whenever Bb > 1).
    z2 = z_ref[...].reshape(R, D)                       # f32 activations

    # Fused Q / gate(z-side) projection: one MXU push, halves split once on the lane axis.
    q_g = jnp.dot(z2.astype(mxu_dtype), wqg_ref[...],
                  preferred_element_type=jnp.float32) + bqg_ref[...]
    q3 = q_g[:, :D].reshape(Bb, Nq, D).astype(mxu_dtype)
    gz = q_g[:, D:]                                     # f32; gate bias terms already folded in

    k3 = k_sc[...]
    v3 = v_sc[...]

    # Multi-head cross attention, batched over Bb via 3-D einsums; heads are a small static
    # unroll over lane slices, each head's output stored in place at its lane offset.
    scale = 1.0 / math.sqrt(head_dim)
    for h in range(num_heads):
        sl = slice(h * head_dim, (h + 1) * head_dim)
        s = jnp.einsum('bqd,bkd->bqk', q3[:, :, sl], k3[:, :, sl],
                       preferred_element_type=jnp.float32) * scale      # [Bb, Nq, Lt] f32
        s = s - jnp.max(s, axis=-1, keepdims=True)
        p = jnp.exp(s)
        denom = jnp.sum(p, axis=-1, keepdims=True)
        if approx_recip:
            p = p * pl.reciprocal(denom, approx=True)
        else:
            p = p / denom
        o_h = jnp.einsum('bqk,bkd->bqd', p.astype(mxu_dtype), v3[:, :, sl],
                         preferred_element_type=jnp.float32)
        attn_sc[:, sl] = o_h.reshape(R, head_dim)       # no H-way concat

    # Fused output projection + gate(ctx-side) projection (Wo@Wg_c folded on the host):
    # a single [R,D]@[D,2D] MXU pass yields both the attention residual and the gate term.
    o_g = jnp.dot(attn_sc[...].astype(mxu_dtype), wog_ref[...],
                  preferred_element_type=jnp.float32) + bog_ref[...]
    ctx = z2 + o_g[:, :D]                               # mmcv MHA residual (identity = query)

    g = jax.nn.sigmoid(_layernorm(gz + o_g[:, D:], gln_g_ref[...], gln_b_ref[...]))
    y = _layernorm(z2 + g * ctx, nln_g_ref[...], nln_b_ref[...])
    out_ref[...] = y.reshape(Bb, Nq, D).astype(out_ref.dtype)


def _vmem_limit_bytes():
    """Per-generation scoped-VMEM budget: ~96 MiB on 128-MiB parts (v5e/v6e), ~48 MiB on v7x."""
    cap = 128 * 1024 * 1024
    try:
        cap = int(pltpu.get_tpu_info().vmem_capacity_bytes)
    except Exception:        # conservative fallback (e.g. interpret mode / older runtimes)
        pass
    return int(min(cap * 3 // 4, 100 * 1024 * 1024))


def _pick_blocks(B, Np, Lt, D, block_b, block_np, weight_bytes, vmem_limit):
    """Pick (block_b, block_np): R=block_b*block_np ~ 256-1024, >=~8 grid steps when shapes
    allow, per-step working set within the VMEM budget.  User-provided valid values win."""
    def np_cands():
        cands = {Np}
        if Np % 8 == 0:
            cands.update(d for d in range(8, Np + 1, 8) if Np % d == 0)
        return sorted(cands)

    def step_bytes(bb, bn):
        rows = bb * bn
        act = 4 * rows * D * 4                          # z + out blocks, double-buffered f32
        txt = 2 * bb * Lt * D * 4                       # text block, double-buffered f32
        scr = rows * D * 4 + 2 * bb * Lt * D * 2        # attn f32 + K/V bf16 scratch
        tmp = 10 * rows * D * 4 + 6 * bb * Lt * D * 4   # live f32 intermediates (review budget)
        return act + txt + scr + tmp + weight_bytes

    auto_np = (block_np is None or block_np <= 0 or Np % block_np != 0
               or (block_np != Np and block_np % 8 != 0))
    if auto_np:
        fit = [d for d in np_cands() if d <= 512]
        block_np = max(fit) if fit else min(np_cands())

    # In-kernel leading-dim folds are only layout-trivial when token counts are 8-aligned.
    fold_ok = (block_np % 8 == 0) and (Lt % 8 == 0)
    auto_b = (block_b is None or block_b <= 0 or B % block_b != 0
              or (block_b > 1 and not fold_ok))
    if auto_b:
        block_b = 1
        if fold_ok:
            for d in range(2, B + 1):
                if B % d == 0 and d * block_np <= 1024 and \
                        step_bytes(d, block_np) <= vmem_limit:
                    block_b = d

    # Prefer >= 8 grid steps (DMA/compute overlap + v7x megacore sharding) without dropping
    # the per-step row count below ~128 (MXU M-dim utilization).
    MIN_ROWS = 128
    def steps(bb, bn):
        return (B // bb) * (Np // bn)
    while auto_b and steps(block_b, block_np) < 8 and block_b > 1:
        nxt = max(d for d in range(1, block_b) if B % d == 0)
        if nxt * block_np < MIN_ROWS:
            break
        block_b = nxt
    if auto_np and steps(block_b, block_np) < 8 and Np % 8 == 0:
        cands = sorted(d for d in np_cands() if d < block_np and d % 8 == 0)
        while steps(block_b, block_np) < 8 and cands:
            nxt = cands.pop()
            if block_b * nxt < MIN_ROWS:
                break
            block_np = nxt

    # Final VMEM guard (auto-chosen dims only).
    while auto_b and block_b > 1 and step_bytes(block_b, block_np) > vmem_limit:
        block_b = max(d for d in range(1, block_b) if B % d == 0)
    while auto_np and Np % 8 == 0 and block_np > 8 and \
            step_bytes(block_b, block_np) > vmem_limit:
        smaller = [d for d in np_cands() if d < block_np and d % 8 == 0]
        if not smaller:
            break
        block_np = max(smaller)

    return block_b, block_np


def _const_spec(shape):
    """Constant weight/bias spec: fetched once (constant index_map), single-buffered."""
    imap = lambda b, n: (0, 0)
    try:
        return pl.BlockSpec(shape, imap, pipeline_mode=pl.Buffered(1))
    except TypeError:           # older BlockSpec signature without pipeline_mode
        return pl.BlockSpec(shape, imap)


def spatial_question_integrator(z, text, params, *, num_heads,
                                block_b=None, block_np=None,
                                mxu_dtype=jnp.bfloat16,
                                out_dtype=None,
                                approx_recip=True):
    B, Np, D = z.shape
    _, Lt, _ = text.shape
    head_dim = D // num_heads
    assert num_heads * head_dim == D, "hidden_dim must be divisible by num_heads"
    out_dtype = z.dtype if out_dtype is None else out_dtype

    f32 = jnp.float32
    # Host-side weight folding (exact in f32):
    #   gate_pre = z@Wg_z + ctx@Wg_c + bg,  ctx = z + attn@Wo + bo
    #            = z@(Wg_z + Wg_c) + attn@(Wo@Wg_c) + (bg + bo@Wg_c)
    wo_wgc = jnp.dot(params["wo"].astype(f32), params["wg_c"].astype(f32))
    bo_wgc = jnp.dot(params["bo"].astype(f32), params["wg_c"].astype(f32))
    w_q_g = jnp.concatenate([params["wq"], params["wg_z"] + params["wg_c"]],
                            axis=1).astype(mxu_dtype)
    b_q_g = jnp.concatenate([params["bq"], params["bg"] + bo_wgc], axis=1).astype(f32)
    w_kv = jnp.concatenate([params["wk"], params["wv"]], axis=1).astype(mxu_dtype)
    b_kv = jnp.concatenate([params["bk"], params["bv"]], axis=1).astype(f32)
    w_o_g = jnp.concatenate([params["wo"], wo_wgc], axis=1).astype(mxu_dtype)
    b_o_g = jnp.concatenate([params["bo"], jnp.zeros_like(params["bo"])],
                            axis=1).astype(f32)
    gln_g = params["gln_g"].astype(f32)
    gln_b = params["gln_b"].astype(f32)
    nln_g = params["nln_g"].astype(f32)
    nln_b = params["nln_b"].astype(f32)

    weight_bytes = (w_q_g.size + w_kv.size + w_o_g.size) * 2 + \
                   (b_q_g.size + b_kv.size + b_o_g.size + 4 * D) * 4
    vmem_limit = _vmem_limit_bytes()
    block_b, block_np = _pick_blocks(B, Np, Lt, D, block_b, block_np,
                                     weight_bytes, vmem_limit)
    nb, nn = B // block_b, Np // block_np

    kernel = functools.partial(_sqi_kernel, num_heads=num_heads, head_dim=head_dim,
                               mxu_dtype=mxu_dtype, approx_recip=approx_recip)

    # Advisory cost estimate so XLA schedules surrounding ops sensibly.
    flops = int(2 * B * Np * D * 2 * D          # z @ [Wq | Wg]
                + 2 * B * Lt * D * 2 * D        # text @ [Wk | Wv] (hoisted: once per batch)
                + 4 * B * Np * Lt * D           # scores + PV
                + 2 * B * Np * D * 2 * D)       # attn @ [Wo | Wo@Wg_c]
    transcendentals = int(B * num_heads * Np * Lt + B * Np * D + 2 * B * Np)
    bytes_accessed = int((2 * B * Np * D + B * Lt * D) * 4
                         + (w_q_g.size + w_kv.size + w_o_g.size) * 2
                         + (b_q_g.size + b_kv.size + b_o_g.size + 4 * D) * 4)

    return pl.pallas_call(
        kernel,
        out_shape=jax.ShapeDtypeStruct((B, Np, D), out_dtype),
        grid_spec=pltpu.PrefetchScalarGridSpec(
            num_scalar_prefetch=0,
            grid=(nb, nn),
            in_specs=[
                pl.BlockSpec((block_b, block_np, D), lambda b, n: (b, n, 0)),   # z
                pl.BlockSpec((block_b, Lt, D), lambda b, n: (b, 0, 0)),         # text
                _const_spec((D, 2 * D)), _const_spec((1, 2 * D)),               # [Wq|Wg], bias
                _const_spec((D, 2 * D)), _const_spec((1, 2 * D)),               # [Wk|Wv], bias
                _const_spec((D, 2 * D)), _const_spec((1, 2 * D)),               # [Wo|Wo@Wg_c], bias
                _const_spec((1, D)), _const_spec((1, D)),                       # gate LN gamma/beta
                _const_spec((1, D)), _const_spec((1, D)),                       # out  LN gamma/beta
            ],
            out_specs=pl.BlockSpec((block_b, block_np, D), lambda b, n: (b, n, 0)),
            scratch_shapes=[
                pltpu.VMEM((block_b, Lt, D), mxu_dtype),            # cached K (per batch block)
                pltpu.VMEM((block_b, Lt, D), mxu_dtype),            # cached V
                pltpu.VMEM((block_b * block_np, D), jnp.float32),   # per-head attn outputs
            ],
        ),
        compiler_params=pltpu.CompilerParams(
            # Np (axis 1) must run sequentially so the K/V scratch written at
            # program_id(1)==0 stays valid across that batch block; batch blocks are
            # sharded across cores (v7x megacore).
            dimension_semantics=("parallel", "arbitrary"),
            vmem_limit_bytes=vmem_limit,
        ),
        cost_estimate=pl.CostEstimate(flops=flops,
                                      transcendentals=transcendentals,
                                      bytes_accessed=bytes_accessed),
    )(z, text, w_q_g, b_q_g, w_kv, b_kv, w_o_g, b_o_g,
      gln_g, gln_b, nln_g, nln_b)


def _reference_f32(z, text, p, num_heads):
    """Exact f32 module semantics (no weight folding, no bf16)."""
    B, Np, D = z.shape
    dh = D // num_heads
    q = jnp.dot(z, p["wq"]) + p["bq"]
    k = jnp.dot(text, p["wk"]) + p["bk"]
    v = jnp.dot(text, p["wv"]) + p["bv"]
    qh = q.reshape(B, Np, num_heads, dh).transpose(0, 2, 1, 3)
    kh = k.reshape(B, -1, num_heads, dh).transpose(0, 2, 1, 3)
    vh = v.reshape(B, -1, num_heads, dh).transpose(0, 2, 1, 3)
    s = jnp.einsum("bhqd,bhkd->bhqk", qh, kh) / math.sqrt(dh)
    pr = jax.nn.softmax(s, axis=-1)
    o = jnp.einsum("bhqk,bhkd->bhqd", pr, vh).transpose(0, 2, 1, 3).reshape(B, Np, D)
    ctx = z + (jnp.dot(o, p["wo"]) + p["bo"])
    g = jnp.dot(z, p["wg_z"]) + jnp.dot(ctx, p["wg_c"]) + p["bg"]
    g = jax.nn.sigmoid(_layernorm(g, p["gln_g"], p["gln_b"]))
    return _layernorm(z + g * ctx, p["nln_g"], p["nln_b"])


def _reference_mixed(z, text, p, num_heads, mxu_dtype=jnp.bfloat16):
    """Pure-JAX mirror of the kernel arithmetic (bf16 MXU operands, f32 accumulation,
    host-folded gate weights, exact softmax) for tight validation."""
    B, Np, D = z.shape
    dh = D // num_heads
    f32 = jnp.float32
    c = lambda x: x.astype(mxu_dtype)
    dot = lambda a, b: jnp.dot(c(a), c(b), preferred_element_type=f32)

    wo_wgc = jnp.dot(p["wo"].astype(f32), p["wg_c"].astype(f32))
    bo_wgc = jnp.dot(p["bo"].astype(f32), p["wg_c"].astype(f32))
    w_q_g = jnp.concatenate([p["wq"], p["wg_z"] + p["wg_c"]], axis=1)
    b_q_g = jnp.concatenate([p["bq"], p["bg"] + bo_wgc], axis=1)
    w_kv = jnp.concatenate([p["wk"], p["wv"]], axis=1)
    b_kv = jnp.concatenate([p["bk"], p["bv"]], axis=1)
    w_o_g = jnp.concatenate([p["wo"], wo_wgc], axis=1)
    b_o_g = jnp.concatenate([p["bo"], jnp.zeros_like(p["bo"])], axis=1)

    q_g = dot(z, w_q_g) + b_q_g
    kv = dot(text, w_kv) + b_kv
    q, gz = q_g[..., :D], q_g[..., D:]
    k, v = kv[..., :D], kv[..., D:]
    qh = q.reshape(B, Np, num_heads, dh).transpose(0, 2, 1, 3)
    kh = k.reshape(B, -1, num_heads, dh).transpose(0, 2, 1, 3)
    vh = v.reshape(B, -1, num_heads, dh).transpose(0, 2, 1, 3)
    s = jnp.einsum("bhqd,bhkd->bhqk", c(qh), c(kh),
                   preferred_element_type=f32) / math.sqrt(dh)
    pr = jax.nn.softmax(s, axis=-1)
    o = jnp.einsum("bhqk,bhkd->bhqd", c(pr), c(vh), preferred_element_type=f32)
    o = o.transpose(0, 2, 1, 3).reshape(B, Np, D)
    o_g = dot(o, w_o_g) + b_o_g
    ctx = z + o_g[..., :D]
    g = jax.nn.sigmoid(_layernorm(gz + o_g[..., D:], p["gln_g"], p["gln_b"]))
    return _layernorm(z + g * ctx, p["nln_g"], p["nln_b"])


if __name__ == "__main__":
    # Small shapes consistent with the module's forward contract.
    B, Np, Lt, D, H = 2, 16, 8, 32, 4

    key = jax.random.PRNGKey(0)
    ks = jax.random.split(key, 16)
    sd = 1.0 / math.sqrt(D)
    params = {
        "wq": jax.random.normal(ks[0], (D, D), jnp.float32) * sd,
        "wk": jax.random.normal(ks[1], (D, D), jnp.float32) * sd,
        "wv": jax.random.normal(ks[2], (D, D), jnp.float32) * sd,
        "bq": jax.random.normal(ks[3], (1, D), jnp.float32) * 0.02,
        "bk": jax.random.normal(ks[4], (1, D), jnp.float32) * 0.02,
        "bv": jax.random.normal(ks[5], (1, D), jnp.float32) * 0.02,
        "wo": jax.random.normal(ks[6], (D, D), jnp.float32) * sd,
        "bo": jax.random.normal(ks[7], (1, D), jnp.float32) * 0.02,
        "wg_z": jax.random.normal(ks[8], (D, D), jnp.float32) * sd,   # Linear(2D->D) weight, z half
        "wg_c": jax.random.normal(ks[9], (D, D), jnp.float32) * sd,   # Linear(2D->D) weight, ctx half
        "bg": jax.random.normal(ks[10], (1, D), jnp.float32) * 0.02,
        "gln_g": jnp.ones((1, D), jnp.float32),
        "gln_b": jnp.zeros((1, D), jnp.float32),
        "nln_g": jnp.ones((1, D), jnp.float32),
        "nln_b": jnp.zeros((1, D), jnp.float32),
    }

    z = jax.random.normal(ks[11], (B, Np, D), jnp.float32)
    text = jax.random.normal(ks[12], (B, Lt, D), jnp.float32)

    ref_mixed = _reference_mixed(z, text, params, H)
    ref_f32 = _reference_f32(z, text, params, H)

    # 1) Auto-tiled path (block sizes picked by the VMEM-aware heuristic).
    out = spatial_question_integrator(z, text, params, num_heads=H)
    out = jax.block_until_ready(out)
    assert out.shape == (B, Np, D)
    assert jnp.allclose(out, ref_mixed, atol=5e-3, rtol=5e-3), \
        "mismatch vs mixed-precision JAX reference"
    assert jnp.allclose(out, ref_f32, atol=1e-1, rtol=1e-1), \
        "mismatch vs f32 JAX reference (sanity)"

    # 2) Explicitly tiled path: multiple Np blocks per batch block exercises the cached
    #    K/V scratch reuse across the sequential Np axis and the multi-step pipeline.
    out2 = spatial_question_integrator(z, text, params, num_heads=H,
                                       block_b=1, block_np=8)
    out2 = jax.block_until_ready(out2)
    assert jnp.allclose(out2, ref_mixed, atol=5e-3, rtol=5e-3), \
        "tiled-path mismatch vs mixed-precision JAX reference"

    print("KERNEL_OK")
</pallas_src>

<mosaic_0001>
module attributes {stable_mosaic.version = 11 : i64} {
  func.func @_sqi_kernel(%arg0: i32, %arg1: i32, %arg2: memref<2x16x32xf32, #tpu.memory_space<vmem>>, %arg3: memref<2x8x32xf32, #tpu.memory_space<vmem>>, %arg4: memref<32x64xbf16, #tpu.memory_space<vmem>>, %arg5: memref<1x64xf32, #tpu.memory_space<vmem>>, %arg6: memref<32x64xbf16, #tpu.memory_space<vmem>>, %arg7: memref<1x64xf32, #tpu.memory_space<vmem>>, %arg8: memref<32x64xbf16, #tpu.memory_space<vmem>>, %arg9: memref<1x64xf32, #tpu.memory_space<vmem>>, %arg10: memref<1x32xf32, #tpu.memory_space<vmem>>, %arg11: memref<1x32xf32, #tpu.memory_space<vmem>>, %arg12: memref<1x32xf32, #tpu.memory_space<vmem>>, %arg13: memref<1x32xf32, #tpu.memory_space<vmem>>, %arg14: memref<2x16x32xf32, #tpu.memory_space<vmem>>, %arg15: memref<2x8x32xbf16, #tpu.memory_space<vmem>>, %arg16: memref<2x8x32xbf16, #tpu.memory_space<vmem>>, %arg17: memref<32x32xf32, #tpu.memory_space<vmem>>) attributes {dimension_semantics = [#tpu.dimension_semantics<parallel>, #tpu.dimension_semantics<arbitrary>], iteration_bounds = array<i64: 1, 1>, scalar_prefetch = 0 : i64, scratch_operands = 3 : i64, tpu.core_type = #tpu.core_type<tc>, window_params = [{transform_indices = @transform_0, window_bounds = array<i64: 2, 16, 32>}, {transform_indices = @transform_1, window_bounds = array<i64: 2, 8, 32>}, {pipeline_mode = #tpu.pipeline_mode<synchronous>, transform_indices = @transform_2, window_bounds = array<i64: 32, 64>}, {pipeline_mode = #tpu.pipeline_mode<synchronous>, transform_indices = @transform_3, window_bounds = array<i64: 1, 64>}, {pipeline_mode = #tpu.pipeline_mode<synchronous>, transform_indices = @transform_4, window_bounds = array<i64: 32, 64>}, {pipeline_mode = #tpu.pipeline_mode<synchronous>, transform_indices = @transform_5, window_bounds = array<i64: 1, 64>}, {pipeline_mode = #tpu.pipeline_mode<synchronous>, transform_indices = @transform_6, window_bounds = array<i64: 32, 64>}, {pipeline_mode = #tpu.pipeline_mode<synchronous>, transform_indices = @transform_7, window_bounds = array<i64: 1, 64>}, {pipeline_mode = #tpu.pipeline_mode<synchronous>, transform_indices = @transform_8, window_bounds = array<i64: 1, 32>}, {pipeline_mode = #tpu.pipeline_mode<synchronous>, transform_indices = @transform_9, window_bounds = array<i64: 1, 32>}, {pipeline_mode = #tpu.pipeline_mode<synchronous>, transform_indices = @transform_10, window_bounds = array<i64: 1, 32>}, {pipeline_mode = #tpu.pipeline_mode<synchronous>, transform_indices = @transform_11, window_bounds = array<i64: 1, 32>}, {transform_indices = @transform_12, window_bounds = array<i64: 2, 16, 32>}]} {
    %c0_i32 = arith.constant 0 : i32
    %0 = arith.cmpi eq, %arg1, %c0_i32 : i32
    %1 = arith.extui %0 : i1 to i32
    %c0_i32_0 = arith.constant 0 : i32
    %2 = arith.cmpi ne, %1, %c0_i32_0 : i32
    scf.if %2 {
      %c0_67 = arith.constant 0 : index
      %c0_68 = arith.constant 0 : index
      %c0_69 = arith.constant 0 : index
      %165 = vector.load %arg3[%c0_67, %c0_68, %c0_69] : memref<2x8x32xf32, #tpu.memory_space<vmem>>, vector<2x8x32xf32>
      %166 = vector.shape_cast %165 : vector<2x8x32xf32> to vector<16x32xf32>
      %167 = arith.truncf %166 : vector<16x32xf32> to vector<16x32xbf16>
      %c0_70 = arith.constant 0 : index
      %c0_71 = arith.constant 0 : index
      %168 = vector.load %arg6[%c0_70, %c0_71] : memref<32x64xbf16, #tpu.memory_space<vmem>>, vector<32x64xbf16>
      %cst_72 = arith.constant dense<0.000000e+00> : vector<16x64xf32>
      %169 = tpu.matmul %167, %168, %cst_72 {dimension_numbers = #tpu.dot_dimension_numbers<[1], [0], [0], [1], [0, 0, 1, 1], [], []>} : vector<16x32xbf16>, vector<32x64xbf16>, vector<16x64xf32> -> vector<16x64xf32>
      %c0_73 = arith.constant 0 : index
      %c0_74 = arith.constant 0 : index
      %170 = vector.load %arg7[%c0_73, %c0_74] : memref<1x64xf32, #tpu.memory_space<vmem>>, vector<1x64xf32>
      %171 = vector.broadcast %170 : vector<1x64xf32> to vector<16x64xf32>
      %172 = arith.addf %169, %171 : vector<16x64xf32>
      %173 = vector.extract_strided_slice %172 {offsets = [0, 0], sizes = [16, 32], strides = [1, 1]} : vector<16x64xf32> to vector<16x32xf32>
      %174 = vector.shape_cast %173 : vector<16x32xf32> to vector<2x8x32xf32>
      %175 = arith.truncf %174 : vector<2x8x32xf32> to vector<2x8x32xbf16>
      %c0_75 = arith.constant 0 : index
      %c0_76 = arith.constant 0 : index
      %c0_77 = arith.constant 0 : index
      %176 = vector.load %arg15[%c0_75, %c0_76, %c0_77] : memref<2x8x32xbf16, #tpu.memory_space<vmem>>, vector<2x8x32xbf16>
      tpu.vector_store %arg15[%c0_75, %c0_76, %c0_77], %175 {strides = array<i32>} : memref<2x8x32xbf16, #tpu.memory_space<vmem>>, vector<2x8x32xbf16>,
      %177 = vector.extract_strided_slice %172 {offsets = [0, 32], sizes = [16, 32], strides = [1, 1]} : vector<16x64xf32> to vector<16x32xf32>
      %178 = vector.shape_cast %177 : vector<16x32xf32> to vector<2x8x32xf32>
      %179 = arith.truncf %178 : vector<2x8x32xf32> to vector<2x8x32xbf16>
      %c0_78 = arith.constant 0 : index
      %c0_79 = arith.constant 0 : index
      %c0_80 = arith.constant 0 : index
      %180 = vector.load %arg16[%c0_78, %c0_79, %c0_80] : memref<2x8x32xbf16, #tpu.memory_space<vmem>>, vector<2x8x32xbf16>
      tpu.vector_store %arg16[%c0_78, %c0_79, %c0_80], %179 {strides = array<i32>} : memref<2x8x32xbf16, #tpu.memory_space<vmem>>, vector<2x8x32xbf16>,
    } else {
    }
    %c0 = arith.constant 0 : index
    %c0_1 = arith.constant 0 : index
    %c0_2 = arith.constant 0 : index
    %3 = vector.load %arg2[%c0, %c0_1, %c0_2] : memref<2x16x32xf32, #tpu.memory_space<vmem>>, vector<2x16x32xf32>
    %4 = vector.shape_cast %3 : vector<2x16x32xf32> to vector<32x32xf32>
    %5 = arith.truncf %4 : vector<32x32xf32> to vector<32x32xbf16>
    %c0_3 = arith.constant 0 : index
    %c0_4 = arith.constant 0 : index
    %6 = vector.load %arg4[%c0_3, %c0_4] : memref<32x64xbf16, #tpu.memory_space<vmem>>, vector<32x64xbf16>
    %cst = arith.constant dense<0.000000e+00> : vector<32x64xf32>
    %7 = tpu.matmul %5, %6, %cst {dimension_numbers = #tpu.dot_dimension_numbers<[1], [0], [0], [1], [0, 0, 1, 1], [], []>} : vector<32x32xbf16>, vector<32x64xbf16>, vector<32x64xf32> -> vector<32x64xf32>
    %c0_5 = arith.constant 0 : index
    %c0_6 = arith.constant 0 : index
    %8 = vector.load %arg5[%c0_5, %c0_6] : memref<1x64xf32, #tpu.memory_space<vmem>>, vector<1x64xf32>
    %9 = vector.broadcast %8 : vector<1x64xf32> to vector<32x64xf32>
    %10 = arith.addf %7, %9 : vector<32x64xf32>
    %11 = vector.extract_strided_slice %10 {offsets = [0, 0], sizes = [32, 32], strides = [1, 1]} : vector<32x64xf32> to vector<32x32xf32>
    %12 = vector.shape_cast %11 : vector<32x32xf32> to vector<2x16x32xf32>
    %13 = arith.truncf %12 : vector<2x16x32xf32> to vector<2x16x32xbf16>
    %14 = vector.extract_strided_slice %10 {offsets = [0, 32], sizes = [32, 32], strides = [1, 1]} : vector<32x64xf32> to vector<32x32xf32>
    %c0_7 = arith.constant 0 : index
    %c0_8 = arith.constant 0 : index
    %c0_9 = arith.constant 0 : index
    %15 = vector.load %arg15[%c0_7, %c0_8, %c0_9] : memref<2x8x32xbf16, #tpu.memory_space<vmem>>, vector<2x8x32xbf16>
    %c0_10 = arith.constant 0 : index
    %c0_11 = arith.constant 0 : index
    %c0_12 = arith.constant 0 : index
    %16 = vector.load %arg16[%c0_10, %c0_11, %c0_12] : memref<2x8x32xbf16, #tpu.memory_space<vmem>>, vector<2x8x32xbf16>
    %17 = vector.extract_strided_slice %13 {offsets = [0, 0, 0], sizes = [2, 16, 8], strides = [1, 1, 1]} : vector<2x16x32xbf16> to vector<2x16x8xbf16>
    %18 = vector.extract_strided_slice %15 {offsets = [0, 0, 0], sizes = [2, 8, 8], strides = [1, 1, 1]} : vector<2x8x32xbf16> to vector<2x8x8xbf16>
    "tpu.trace_start"() <{level = 10 : i32, message = "bqd,bkd->bqk"}> : () -> ()
    %cst_13 = arith.constant dense<0.000000e+00> : vector<2x16x8xf32>
    %19 = tpu.matmul %17, %18, %cst_13 {dimension_numbers = #tpu.dot_dimension_numbers<[2], [2], [1], [1], [0, 0, 0, 1, 1, 1], [0], [0]>} : vector<2x16x8xbf16>, vector<2x8x8xbf16>, vector<2x16x8xf32> -> vector<2x16x8xf32>
    "tpu.trace_stop"() : () -> ()
    %cst_14 = arith.constant 0.353553385 : f32
    %20 = vector.broadcast %cst_14 : f32 to vector<2x16x8xf32>
    %21 = arith.mulf %19, %20 : vector<2x16x8xf32>
    %cst_15 = arith.constant dense<0xFF800000> : vector<2x16xf32>
    %22 = vector.multi_reduction <maximumf>, %21, %cst_15 [2] : vector<2x16x8xf32> to vector<2x16xf32>
    %23 = vector.shape_cast %22 : vector<2x16xf32> to vector<2x16x1xf32>
    %24 = vector.broadcast %23 : vector<2x16x1xf32> to vector<2x16x8xf32>
    %25 = arith.subf %21, %24 : vector<2x16x8xf32>
    %26 = math.exp %25 : vector<2x16x8xf32>
    %cst_16 = arith.constant dense<0.000000e+00> : vector<2x16xf32>
    %27 = vector.multi_reduction <add>, %26, %cst_16 [2] : vector<2x16x8xf32> to vector<2x16xf32>
    %28 = vector.shape_cast %27 : vector<2x16xf32> to vector<2x16x1xf32>
    %29 = tpu.reciprocal %28 {approx = true} : vector<2x16x1xf32> -> vector<2x16x1xf32>
    %30 = vector.broadcast %29 : vector<2x16x1xf32> to vector<2x16x8xf32>
    %31 = arith.mulf %26, %30 : vector<2x16x8xf32>
    %32 = arith.truncf %31 : vector<2x16x8xf32> to vector<2x16x8xbf16>
    %33 = vector.extract_strided_slice %16 {offsets = [0, 0, 0], sizes = [2, 8, 8], strides = [1, 1, 1]} : vector<2x8x32xbf16> to vector<2x8x8xbf16>
    "tpu.trace_start"() <{level = 10 : i32, message = "bqk,bkd->bqd"}> : () -> ()
    %cst_17 = arith.constant dense<0.000000e+00> : vector<2x16x8xf32>
    %34 = tpu.matmul %32, %33, %cst_17 {dimension_numbers = #tpu.dot_dimension_numbers<[2], [1], [1], [2], [0, 0, 0, 1, 1, 2], [0], [0]>} : vector<2x16x8xbf16>, vector<2x8x8xbf16>, vector<2x16x8xf32> -> vector<2x16x8xf32>
    "tpu.trace_stop"() : () -> ()
    %35 = vector.shape_cast %34 : vector<2x16x8xf32> to vector<32x8xf32>
    %c0_18 = arith.constant 0 : index
    %c0_19 = arith.constant 0 : index
    %36 = vector.load %arg17[%c0_18, %c0_19] : memref<32x32xf32, #tpu.memory_space<vmem>>, vector<32x8xf32>
    tpu.vector_store %arg17[%c0_18, %c0_19], %35 {strides = array<i32>} : memref<32x32xf32, #tpu.memory_space<vmem>>, vector<32x8xf32>,
    %37 = vector.extract_strided_slice %13 {offsets = [0, 0, 8], sizes = [2, 16, 8], strides = [1, 1, 1]} : vector<2x16x32xbf16> to vector<2x16x8xbf16>
    %38 = vector.extract_strided_slice %15 {offsets = [0, 0, 8], sizes = [2, 8, 8], strides = [1, 1, 1]} : vector<2x8x32xbf16> to vector<2x8x8xbf16>
    "tpu.trace_start"() <{level = 10 : i32, message = "bqd,bkd->bqk"}> : () -> ()
    %cst_20 = arith.constant dense<0.000000e+00> : vector<2x16x8xf32>
    %39 = tpu.matmul %37, %38, %cst_20 {dimension_numbers = #tpu.dot_dimension_numbers<[2], [2], [1], [1], [0, 0, 0, 1, 1, 1], [0], [0]>} : vector<2x16x8xbf16>, vector<2x8x8xbf16>, vector<2x16x8xf32> -> vector<2x16x8xf32>
    "tpu.trace_stop"() : () -> ()
    %cst_21 = arith.constant 0.353553385 : f32
    %40 = vector.broadcast %cst_21 : f32 to vector<2x16x8xf32>
    %41 = arith.mulf %39, %40 : vector<2x16x8xf32>
    %cst_22 = arith.constant dense<0xFF800000> : vector<2x16xf32>
    %42 = vector.multi_reduction <maximumf>, %41, %cst_22 [2] : vector<2x16x8xf32> to vector<2x16xf32>
    %43 = vector.shape_cast %42 : vector<2x16xf32> to vector<2x16x1xf32>
    %44 = vector.broadcast %43 : vector<2x16x1xf32> to vector<2x16x8xf32>
    %45 = arith.subf %41, %44 : vector<2x16x8xf32>
    %46 = math.exp %45 : vector<2x16x8xf32>
    %cst_23 = arith.constant dense<0.000000e+00> : vector<2x16xf32>
    %47 = vector.multi_reduction <add>, %46, %cst_23 [2] : vector<2x16x8xf32> to vector<2x16xf32>
    %48 = vector.shape_cast %47 : vector<2x16xf32> to vector<2x16x1xf32>
    %49 = tpu.reciprocal %48 {approx = true} : vector<2x16x1xf32> -> vector<2x16x1xf32>
    %50 = vector.broadcast %49 : vector<2x16x1xf32> to vector<2x16x8xf32>
    %51 = arith.mulf %46, %50 : vector<2x16x8xf32>
    %52 = arith.truncf %51 : vector<2x16x8xf32> to vector<2x16x8xbf16>
    %53 = vector.extract_strided_slice %16 {offsets = [0, 0, 8], sizes = [2, 8, 8], strides = [1, 1, 1]} : vector<2x8x32xbf16> to vector<2x8x8xbf16>
    "tpu.trace_start"() <{level = 10 : i32, message = "bqk,bkd->bqd"}> : () -> ()
    %cst_24 = arith.constant dense<0.000000e+00> : vector<2x16x8xf32>
    %54 = tpu.matmul %52, %53, %cst_24 {dimension_numbers = #tpu.dot_dimension_numbers<[2], [1], [1], [2], [0, 0, 0, 1, 1, 2], [0], [0]>} : vector<2x16x8xbf16>, vector<2x8x8xbf16>, vector<2x16x8xf32> -> vector<2x16x8xf32>
    "tpu.trace_stop"() : () -> ()
    %55 = vector.shape_cast %54 : vector<2x16x8xf32> to vector<32x8xf32>
    %c0_25 = arith.constant 0 : index
    %c8 = arith.constant 8 : index
    %56 = vector.load %arg17[%c0_25, %c8] : memref<32x32xf32, #tpu.memory_space<vmem>>, vector<32x8xf32>
    tpu.vector_store %arg17[%c0_25, %c8], %55 {strides = array<i32>} : memref<32x32xf32, #tpu.memory_space<vmem>>, vector<32x8xf32>,
    %57 = vector.extract_strided_slice %13 {offsets = [0, 0, 16], sizes = [2, 16, 8], strides = [1, 1, 1]} : vector<2x16x32xbf16> to vector<2x16x8xbf16>
    %58 = vector.extract_strided_slice %15 {offsets = [0, 0, 16], sizes = [2, 8, 8], strides = [1, 1, 1]} : vector<2x8x32xbf16> to vector<2x8x8xbf16>
    "tpu.trace_start"() <{level = 10 : i32, message = "bqd,bkd->bqk"}> : () -> ()
    %cst_26 = arith.constant dense<0.000000e+00> : vector<2x16x8xf32>
    %59 = tpu.matmul %57, %58, %cst_26 {dimension_numbers = #tpu.dot_dimension_numbers<[2], [2], [1], [1], [0, 0, 0, 1, 1, 1], [0], [0]>} : vector<2x16x8xbf16>, vector<2x8x8xbf16>, vector<2x16x8xf32> -> vector<2x16x8xf32>
    "tpu.trace_stop"() : () -> ()
    %cst_27 = arith.constant 0.353553385 : f32
    %60 = vector.broadcast %cst_27 : f32 to vector<2x16x8xf32>
    %61 = arith.mulf %59, %60 : vector<2x16x8xf32>
    %cst_28 = arith.constant dense<0xFF800000> : vector<2x16xf32>
    %62 = vector.multi_reduction <maximumf>, %61, %cst_28 [2] : vector<2x16x8xf32> to vector<2x16xf32>
    %63 = vector.shape_cast %62 : vector<2x16xf32> to vector<2x16x1xf32>
    %64 = vector.broadcast %63 : vector<2x16x1xf32> to vector<2x16x8xf32>
    %65 = arith.subf %61, %64 : vector<2x16x8xf32>
    %66 = math.exp %65 : vector<2x16x8xf32>
    %cst_29 = arith.constant dense<0.000000e+00> : vector<2x16xf32>
    %67 = vector.multi_reduction <add>, %66, %cst_29 [2] : vector<2x16x8xf32> to vector<2x16xf32>
    %68 = vector.shape_cast %67 : vector<2x16xf32> to vector<2x16x1xf32>
    %69 = tpu.reciprocal %68 {approx = true} : vector<2x16x1xf32> -> vector<2x16x1xf32>
    %70 = vector.broadcast %69 : vector<2x16x1xf32> to vector<2x16x8xf32>
    %71 = arith.mulf %66, %70 : vector<2x16x8xf32>
    %72 = arith.truncf %71 : vector<2x16x8xf32> to vector<2x16x8xbf16>
    %73 = vector.extract_strided_slice %16 {offsets = [0, 0, 16], sizes = [2, 8, 8], strides = [1, 1, 1]} : vector<2x8x32xbf16> to vector<2x8x8xbf16>
    "tpu.trace_start"() <{level = 10 : i32, message = "bqk,bkd->bqd"}> : () -> ()
    %cst_30 = arith.constant dense<0.000000e+00> : vector<2x16x8xf32>
    %74 = tpu.matmul %72, %73, %cst_30 {dimension_numbers = #tpu.dot_dimension_numbers<[2], [1], [1], [2], [0, 0, 0, 1, 1, 2], [0], [0]>} : vector<2x16x8xbf16>, vector<2x8x8xbf16>, vector<2x16x8xf32> -> vector<2x16x8xf32>
    "tpu.trace_stop"() : () -> ()
    %75 = vector.shape_cast %74 : vector<2x16x8xf32> to vector<32x8xf32>
    %c0_31 = arith.constant 0 : index
    %c16 = arith.constant 16 : index
    %76 = vector.load %arg17[%c0_31, %c16] : memref<32x32xf32, #tpu.memory_space<vmem>>, vector<32x8xf32>
    tpu.vector_store %arg17[%c0_31, %c16], %75 {strides = array<i32>} : memref<32x32xf32, #tpu.memory_space<vmem>>, vector<32x8xf32>,
    %77 = vector.extract_strided_slice %13 {offsets = [0, 0, 24], sizes = [2, 16, 8], strides = [1, 1, 1]} : vector<2x16x32xbf16> to vector<2x16x8xbf16>
    %78 = vector.extract_strided_slice %15 {offsets = [0, 0, 24], sizes = [2, 8, 8], strides = [1, 1, 1]} : vector<2x8x32xbf16> to vector<2x8x8xbf16>
    "tpu.trace_start"() <{level = 10 : i32, message = "bqd,bkd->bqk"}> : () -> ()
    %cst_32 = arith.constant dense<0.000000e+00> : vector<2x16x8xf32>
    %79 = tpu.matmul %77, %78, %cst_32 {dimension_numbers = #tpu.dot_dimension_numbers<[2], [2], [1], [1], [0, 0, 0, 1, 1, 1], [0], [0]>} : vector<2x16x8xbf16>, vector<2x8x8xbf16>, vector<2x16x8xf32> -> vector<2x16x8xf32>
    "tpu.trace_stop"() : () -> ()
    %cst_33 = arith.constant 0.353553385 : f32
    %80 = vector.broadcast %cst_33 : f32 to vector<2x16x8xf32>
    %81 = arith.mulf %79, %80 : vector<2x16x8xf32>
    %cst_34 = arith.constant dense<0xFF800000> : vector<2x16xf32>
    %82 = vector.multi_reduction <maximumf>, %81, %cst_34 [2] : vector<2x16x8xf32> to vector<2x16xf32>
    %83 = vector.shape_cast %82 : vector<2x16xf32> to vector<2x16x1xf32>
    %84 = vector.broadcast %83 : vector<2x16x1xf32> to vector<2x16x8xf32>
    %85 = arith.subf %81, %84 : vector<2x16x8xf32>
    %86 = math.exp %85 : vector<2x16x8xf32>
    %cst_35 = arith.constant dense<0.000000e+00> : vector<2x16xf32>
    %87 = vector.multi_reduction <add>, %86, %cst_35 [2] : vector<2x16x8xf32> to vector<2x16xf32>
    %88 = vector.shape_cast %87 : vector<2x16xf32> to vector<2x16x1xf32>
    %89 = tpu.reciprocal %88 {approx = true} : vector<2x16x1xf32> -> vector<2x16x1xf32>
    %90 = vector.broadcast %89 : vector<2x16x1xf32> to vector<2x16x8xf32>
    %91 = arith.mulf %86, %90 : vector<2x16x8xf32>
    %92 = arith.truncf %91 : vector<2x16x8xf32> to vector<2x16x8xbf16>
    %93 = vector.extract_strided_slice %16 {offsets = [0, 0, 24], sizes = [2, 8, 8], strides = [1, 1, 1]} : vector<2x8x32xbf16> to vector<2x8x8xbf16>
    "tpu.trace_start"() <{level = 10 : i32, message = "bqk,bkd->bqd"}> : () -> ()
    %cst_36 = arith.constant dense<0.000000e+00> : vector<2x16x8xf32>
    %94 = tpu.matmul %92, %93, %cst_36 {dimension_numbers = #tpu.dot_dimension_numbers<[2], [1], [1], [2], [0, 0, 0, 1, 1, 2], [0], [0]>} : vector<2x16x8xbf16>, vector<2x8x8xbf16>, vector<2x16x8xf32> -> vector<2x16x8xf32>
    "tpu.trace_stop"() : () -> ()
    %95 = vector.shape_cast %94 : vector<2x16x8xf32> to vector<32x8xf32>
    %c0_37 = arith.constant 0 : index
    %c24 = arith.constant 24 : index
    %96 = vector.load %arg17[%c0_37, %c24] : memref<32x32xf32, #tpu.memory_space<vmem>>, vector<32x8xf32>
    tpu.vector_store %arg17[%c0_37, %c24], %95 {strides = array<i32>} : memref<32x32xf32, #tpu.memory_space<vmem>>, vector<32x8xf32>,
    %c0_38 = arith.constant 0 : index
    %c0_39 = arith.constant 0 : index
    %97 = vector.load %arg17[%c0_38, %c0_39] : memref<32x32xf32, #tpu.memory_space<vmem>>, vector<32x32xf32>
    %98 = arith.truncf %97 : vector<32x32xf32> to vector<32x32xbf16>
    %c0_40 = arith.constant 0 : index
    %c0_41 = arith.constant 0 : index
    %99 = vector.load %arg8[%c0_40, %c0_41] : memref<32x64xbf16, #tpu.memory_space<vmem>>, vector<32x64xbf16>
    %cst_42 = arith.constant dense<0.000000e+00> : vector<32x64xf32>
    %100 = tpu.matmul %98, %99, %cst_42 {dimension_numbers = #tpu.dot_dimension_numbers<[1], [0], [0], [1], [0, 0, 1, 1], [], []>} : vector<32x32xbf16>, vector<32x64xbf16>, vector<32x64xf32> -> vector<32x64xf32>
    %c0_43 = arith.constant 0 : index
    %c0_44 = arith.constant 0 : index
    %101 = vector.load %arg9[%c0_43, %c0_44] : memref<1x64xf32, #tpu.memory_space<vmem>>, vector<1x64xf32>
    %102 = vector.broadcast %101 : vector<1x64xf32> to vector<32x64xf32>
    %103 = arith.addf %100, %102 : vector<32x64xf32>
    %104 = vector.extract_strided_slice %103 {offsets = [0, 0], sizes = [32, 32], strides = [1, 1]} : vector<32x64xf32> to vector<32x32xf32>
    %105 = arith.addf %4, %104 : vector<32x32xf32>
    %106 = vector.extract_strided_slice %103 {offsets = [0, 32], sizes = [32, 32], strides = [1, 1]} : vector<32x64xf32> to vector<32x32xf32>
    %107 = arith.addf %14, %106 : vector<32x32xf32>
    %c0_45 = arith.constant 0 : index
    %c0_46 = arith.constant 0 : index
    %108 = vector.load %arg10[%c0_45, %c0_46] : memref<1x32xf32, #tpu.memory_space<vmem>>, vector<1x32xf32>
    %c0_47 = arith.constant 0 : index
    %c0_48 = arith.constant 0 : index
    %109 = vector.load %arg11[%c0_47, %c0_48] : memref<1x32xf32, #tpu.memory_space<vmem>>, vector<1x32xf32>
    %cst_49 = arith.constant dense<0.000000e+00> : vector<32xf32>
    %110 = vector.multi_reduction <add>, %107, %cst_49 [1] : vector<32x32xf32> to vector<32xf32>
    %111 = vector.shape_cast %110 : vector<32xf32> to vector<32x1xf32>
    %cst_50 = arith.constant 3.200000e+01 : f32
    %112 = vector.broadcast %cst_50 : f32 to vector<32x1xf32>
    %113 = arith.divf %111, %112 : vector<32x1xf32>
    %114 = vector.broadcast %113 : vector<32x1xf32> to vector<32x32xf32>
    %115 = arith.subf %107, %114 : vector<32x32xf32>
    %116 = arith.mulf %115, %115 : vector<32x32xf32>
    %cst_51 = arith.constant dense<0.000000e+00> : vector<32xf32>
    %117 = vector.multi_reduction <add>, %116, %cst_51 [1] : vector<32x32xf32> to vector<32xf32>
    %118 = vector.shape_cast %117 : vector<32xf32> to vector<32x1xf32>
    %cst_52 = arith.constant 3.200000e+01 : f32
    %119 = vector.broadcast %cst_52 : f32 to vector<32x1xf32>
    %120 = arith.divf %118, %119 : vector<32x1xf32>
    %121 = vector.broadcast %113 : vector<32x1xf32> to vector<32x32xf32>
    %122 = arith.subf %107, %121 : vector<32x32xf32>
    %cst_53 = arith.constant 9.99999974E-6 : f32
    %123 = vector.broadcast %cst_53 : f32 to vector<32x1xf32>
    %124 = arith.addf %120, %123 : vector<32x1xf32>
    %125 = math.rsqrt %124 : vector<32x1xf32>
    %126 = vector.broadcast %125 : vector<32x1xf32> to vector<32x32xf32>
    %127 = arith.mulf %122, %126 : vector<32x32xf32>
    %128 = vector.broadcast %108 : vector<1x32xf32> to vector<32x32xf32>
    %129 = arith.mulf %127, %128 : vector<32x32xf32>
    %130 = vector.broadcast %109 : vector<1x32xf32> to vector<32x32xf32>
    %131 = arith.addf %129, %130 : vector<32x32xf32>
    %132 = arith.negf %131 : vector<32x32xf32>
    %133 = math.exp %132 : vector<32x32xf32>
    %cst_54 = arith.constant 1.000000e+00 : f32
    %134 = vector.broadcast %cst_54 : f32 to vector<32x32xf32>
    %135 = arith.addf %134, %133 : vector<32x32xf32>
    %136 = arith.divf %134, %135 : vector<32x32xf32>
    %137 = arith.mulf %136, %105 : vector<32x32xf32>
    %138 = arith.addf %4, %137 : vector<32x32xf32>
    %c0_55 = arith.constant 0 : index
    %c0_56 = arith.constant 0 : index
    %139 = vector.load %arg12[%c0_55, %c0_56] : memref<1x32xf32, #tpu.memory_space<vmem>>, vector<1x32xf32>
    %c0_57 = arith.constant 0 : index
    %c0_58 = arith.constant 0 : index
    %140 = vector.load %arg13[%c0_57, %c0_58] : memref<1x32xf32, #tpu.memory_space<vmem>>, vector<1x32xf32>
    %cst_59 = arith.constant dense<0.000000e+00> : vector<32xf32>
    %141 = vector.multi_reduction <add>, %138, %cst_59 [1] : vector<32x32xf32> to vector<32xf32>
    %142 = vector.shape_cast %141 : vector<32xf32> to vector<32x1xf32>
    %cst_60 = arith.constant 3.200000e+01 : f32
    %143 = vector.broadcast %cst_60 : f32 to vector<32x1xf32>
    %144 = arith.divf %142, %143 : vector<32x1xf32>
    %145 = vector.broadcast %144 : vector<32x1xf32> to vector<32x32xf32>
    %146 = arith.subf %138, %145 : vector<32x32xf32>
    %147 = arith.mulf %146, %146 : vector<32x32xf32>
    %cst_61 = arith.constant dense<0.000000e+00> : vector<32xf32>
    %148 = vector.multi_reduction <add>, %147, %cst_61 [1] : vector<32x32xf32> to vector<32xf32>
    %149 = vector.shape_cast %148 : vector<32xf32> to vector<32x1xf32>
    %cst_62 = arith.constant 3.200000e+01 : f32
    %150 = vector.broadcast %cst_62 : f32 to vector<32x1xf32>
    %151 = arith.divf %149, %150 : vector<32x1xf32>
    %152 = vector.broadcast %144 : vector<32x1xf32> to vector<32x32xf32>
    %153 = arith.subf %138, %152 : vector<32x32xf32>
    %cst_63 = arith.constant 9.99999974E-6 : f32
    %154 = vector.broadcast %cst_63 : f32 to vector<32x1xf32>
    %155 = arith.addf %151, %154 : vector<32x1xf32>
    %156 = math.rsqrt %155 : vector<32x1xf32>
    %157 = vector.broadcast %156 : vector<32x1xf32> to vector<32x32xf32>
    %158 = arith.mulf %153, %157 : vector<32x32xf32>
    %159 = vector.broadcast %139 : vector<1x32xf32> to vector<32x32xf32>
    %160 = arith.mulf %158, %159 : vector<32x32xf32>
    %161 = vector.broadcast %140 : vector<1x32xf32> to vector<32x32xf32>
    %162 = arith.addf %160, %161 : vector<32x32xf32>
    %163 = vector.shape_cast %162 : vector<32x32xf32> to vector<2x16x32xf32>
    %c0_64 = arith.constant 0 : index
    %c0_65 = arith.constant 0 : index
    %c0_66 = arith.constant 0 : index
    %164 = vector.load %arg14[%c0_64, %c0_65, %c0_66] : memref<2x16x32xf32, #tpu.memory_space<vmem>>, vector<2x16x32xf32>
    tpu.vector_store %arg14[%c0_64, %c0_65, %c0_66], %163 {strides = array<i32>} : memref<2x16x32xf32, #tpu.memory_space<vmem>>, vector<2x16x32xf32>,
    return
  }
  func.func @transform_0(%arg0: i32, %arg1: i32) -> (i32, i32, i32) {
    %c0_i32 = arith.constant 0 : i32
    %c0_i32_0 = arith.constant 0 : i32
    return %arg0, %arg1, %c0_i32 : i32, i32, i32
  }
  func.func @transform_1(%arg0: i32, %arg1: i32) -> (i32, i32, i32) {
    %c0_i32 = arith.constant 0 : i32
    %c0_i32_0 = arith.constant 0 : i32
    %c0_i32_1 = arith.constant 0 : i32
    return %arg0, %c0_i32, %c0_i32_0 : i32, i32, i32
  }
  func.func @transform_2(%arg0: i32, %arg1: i32) -> (i32, i32) {
    %c0_i32 = arith.constant 0 : i32
    %c0_i32_0 = arith.constant 0 : i32
    %c0_i32_1 = arith.constant 0 : i32
    return %c0_i32, %c0_i32_0 : i32, i32
  }
  func.func @transform_3(%arg0: i32, %arg1: i32) -> (i32, i32) {
    %c0_i32 = arith.constant 0 : i32
    %c0_i32_0 = arith.constant 0 : i32
    %c0_i32_1 = arith.constant 0 : i32
    return %c0_i32, %c0_i32_0 : i32, i32
  }
  func.func @transform_4(%arg0: i32, %arg1: i32) -> (i32, i32) {
    %c0_i32 = arith.constant 0 : i32
    %c0_i32_0 = arith.constant 0 : i32
    %c0_i32_1 = arith.constant 0 : i32
    return %c0_i32, %c0_i32_0 : i32, i32
  }
  func.func @transform_5(%arg0: i32, %arg1: i32) -> (i32, i32) {
    %c0_i32 = arith.constant 0 : i32
    %c0_i32_0 = arith.constant 0 : i32
    %c0_i32_1 = arith.constant 0 : i32
    return %c0_i32, %c0_i32_0 : i32, i32
  }
  func.func @transform_6(%arg0: i32, %arg1: i32) -> (i32, i32) {
    %c0_i32 = arith.constant 0 : i32
    %c0_i32_0 = arith.constant 0 : i32
    %c0_i32_1 = arith.constant 0 : i32
    return %c0_i32, %c0_i32_0 : i32, i32
  }
  func.func @transform_7(%arg0: i32, %arg1: i32) -> (i32, i32) {
    %c0_i32 = arith.constant 0 : i32
    %c0_i32_0 = arith.constant 0 : i32
    %c0_i32_1 = arith.constant 0 : i32
    return %c0_i32, %c0_i32_0 : i32, i32
  }
  func.func @transform_8(%arg0: i32, %arg1: i32) -> (i32, i32) {
    %c0_i32 = arith.constant 0 : i32
    %c0_i32_0 = arith.constant 0 : i32
    %c0_i32_1 = arith.constant 0 : i32
    return %c0_i32, %c0_i32_0 : i32, i32
  }
  func.func @transform_9(%arg0: i32, %arg1: i32) -> (i32, i32) {
    %c0_i32 = arith.constant 0 : i32
    %c0_i32_0 = arith.constant 0 : i32
    %c0_i32_1 = arith.constant 0 : i32
    return %c0_i32, %c0_i32_0 : i32, i32
  }
  func.func @transform_10(%arg0: i32, %arg1: i32) -> (i32, i32) {
    %c0_i32 = arith.constant 0 : i32
    %c0_i32_0 = arith.constant 0 : i32
    %c0_i32_1 = arith.constant 0 : i32
    return %c0_i32, %c0_i32_0 : i32, i32
  }
  func.func @transform_11(%arg0: i32, %arg1: i32) -> (i32, i32) {
    %c0_i32 = arith.constant 0 : i32
    %c0_i32_0 = arith.constant 0 : i32
    %c0_i32_1 = arith.constant 0 : i32
    return %c0_i32, %c0_i32_0 : i32, i32
  }
  func.func @transform_12(%arg0: i32, %arg1: i32) -> (i32, i32, i32) {
    %c0_i32 = arith.constant 0 : i32
    %c0_i32_0 = arith.constant 0 : i32
    return %arg0, %arg1, %c0_i32 : i32, i32, i32
  }
}

</mosaic_0001>

<llo_original>
// kernel: tpu_custom_call.1
$region0: #{tpu_custom_call.1}
  #allocation0 [shape = 'u32[]', space=smem, size = 0x4, offset = 0x4, fixed_abs, tag = 'smem constant byte address 0x4 - core index']
  #allocation1 [shape = 'u32[144,128]{1,0:T(1,128)}', space=vmem, size = 0x12000, scoped, tag = 'internal scratch']
  #allocation2 [shape = 'bf16[2,8,32]{2,1,0:T(8,128)(2,1)}', space=vmem, size = 0x1000, scoped, tag = 'scratch operand']
  #allocation3 [shape = 'bf16[2,8,32]{2,1,0:T(8,128)(2,1)}', space=vmem, size = 0x1000, scoped, tag = 'scratch operand']
  #allocation4 [shape = 'f32[32,32]{1,0:T(8,128)}', space=vmem, size = 0x4000, scoped, tag = 'scratch operand']
  %s0 = inlined_call_operand.hbm [shape: f32[2,16,32], index: 0, kind: input, shape index: {}]
  %s1 = inlined_call_operand.hbm [shape: f32[2,8,32], index: 1, kind: input, shape index: {}]
  %s2 = inlined_call_operand.hbm [shape: bf16[32,64], index: 2, kind: input, shape index: {}]
  %s3 = inlined_call_operand.vmem [shape: f32[1,64], index: 3, kind: input, shape index: {}]
  %s4 = inlined_call_operand.hbm [shape: bf16[32,64], index: 4, kind: input, shape index: {}]
  %s5 = inlined_call_operand.vmem [shape: f32[1,64], index: 5, kind: input, shape index: {}]
  %s6 = inlined_call_operand.hbm [shape: bf16[32,64], index: 6, kind: input, shape index: {}]
  %s7 = inlined_call_operand.vmem [shape: f32[1,64], index: 7, kind: input, shape index: {}]
  %s8 = inlined_call_operand.vmem [shape: f32[1,32], index: 8, kind: input, shape index: {}]
  %s9 = inlined_call_operand.vmem [shape: f32[1,32], index: 9, kind: input, shape index: {}]
  %s10 = inlined_call_operand.vmem [shape: f32[1,32], index: 10, kind: input, shape index: {}]
  %s11 = inlined_call_operand.vmem [shape: f32[1,32], index: 11, kind: input, shape index: {}]
  %s12 = inlined_call_operand.hbm [shape: f32[2,16,32], index: 12, kind: output, shape index: {}]
  %s13 = sld [smem:[#allocation0]]
  $region82: #{tpu_custom_call.1} parent=0
    _
  %s15 = ssub.s32 1, %s13
  %s16 = scalar_select 0, %s15, %s13
  $region1: #{tpu_custom_call.1} parent=0
    #allocation5 [shape = 'u8[16384]{0}', space=vmem, size = 0x4000, scoped, tag = 'input window, operand 0, single buffered']
    #allocation6 [shape = 's32[1]{0}', space=sflag, size = 0x4, scoped, tag = 'scoped memory for tpu_custom_call.1']
    #allocation7 [shape = 's32[1]{0}', space=sflag, size = 0x4, scoped, tag = 'scoped memory for tpu_custom_call.1']
    #allocation8 [shape = 'u8[8192]{0}', space=vmem, size = 0x2000, scoped, tag = 'input window, operand 1, single buffered']
    #allocation9 [shape = 's32[1]{0}', space=sflag, size = 0x4, scoped, tag = 'scoped memory for tpu_custom_call.1']
    #allocation10 [shape = 'u8[8192]{0}', space=vmem, size = 0x2000, scoped, tag = 'input window, operand 2, single buffered']
    #allocation11 [shape = 'u8[8192]{0}', space=vmem, size = 0x2000, scoped, tag = 'input window, operand 4, single buffered']
    #allocation12 [shape = 's32[1]{0}', space=sflag, size = 0x4, scoped, tag = 'scoped memory for tpu_custom_call.1']
    #allocation13 [shape = 'u8[8192]{0}', space=vmem, size = 0x2000, scoped, tag = 'input window, operand 6, single buffered']
    #allocation14 [shape = 'u8[16384]{0}', space=vmem, size = 0x4000, scoped, tag = 'output window, operand 0, single buffered']
    %17 = vsyncpa [#allocation6], 0
    %18 = vsyncpa [#allocation9], 0
    %19 = vsyncpa [#allocation12], 0
    %20 = vsyncpa [#allocation7], 0
    // Predicated region
    $region2: #{tpu_custom_call.1} parent=1 // pred_check
      _
    $region3: #{tpu_custom_call.1} parent=1 // pred_check_branch
      %22 = sbr.rel (0) target = $region5
    $region4: #{tpu_custom_call.1} parent=1 // pred_region
      %s24 = ssub.s32 512, 512
      %25 = vsyncadd [#allocation6], %s24
      %s26 = sshll.u32 [#allocation5], 4
      %s27 = int_to_ptr.vmem [resolvable:$true] %s26
      %32 = dma.hbm_to_vmem [thread:$0]  %s0, 512, %s27, [#allocation6], 128, 128, 8
    $region5: #{tpu_custom_call.1} parent=1 // pred_fallthru
      _
    // Predicated region
    $region6: #{tpu_custom_call.1} parent=1 // pred_check
      _
    $region7: #{tpu_custom_call.1} parent=1 // pred_check_branch
      %34 = sbr.rel (0) target = $region9
    $region8: #{tpu_custom_call.1} parent=1 // pred_region
      %s36 = ssub.s32 256, 256
      %37 = vsyncadd [#allocation9], %s36
      %s38 = sshll.u32 [#allocation8], 4
      %s39 = int_to_ptr.vmem [resolvable:$true] %s38
      %44 = dma.hbm_to_vmem [thread:$0]  %s1, 256, %s39, [#allocation9], 128, 128, 8
    $region9: #{tpu_custom_call.1} parent=1 // pred_fallthru
      _
    // Predicated region
    $region10: #{tpu_custom_call.1} parent=1 // pred_check
      _
    $region11: #{tpu_custom_call.1} parent=1 // pred_check_branch
      %46 = sbr.rel (0) target = $region13
    $region12: #{tpu_custom_call.1} parent=1 // pred_region
      %s48 = ssub.s32 256, 256
      %49 = vsyncadd [#allocation9], %s48
      %s50 = sshll.u32 [#allocation10], 4
      %s51 = int_to_ptr.vmem [resolvable:$true] %s50
      %56 = dma.hbm_to_vmem [thread:$0]  %s2, 256, %s51, [#allocation9], 64, 64, 4
    $region13: #{tpu_custom_call.1} parent=1 // pred_fallthru
      _
    // Predicated region
    $region14: #{tpu_custom_call.1} parent=1 // pred_check
      _
    $region15: #{tpu_custom_call.1} parent=1 // pred_check_branch
      %58 = sbr.rel (0) target = $region17
    $region16: #{tpu_custom_call.1} parent=1 // pred_region
      _
    $region17: #{tpu_custom_call.1} parent=1 // pred_fallthru
      _
    // Predicated region
    $region18: #{tpu_custom_call.1} parent=1 // pred_check
      _
    $region19: #{tpu_custom_call.1} parent=1 // pred_check_branch
      %60 = sbr.rel (0) target = $region21
    $region20: #{tpu_custom_call.1} parent=1 // pred_region
      %s62 = ssub.s32 256, 256
      %63 = vsyncadd [#allocation12], %s62
      %s64 = sshll.u32 [#allocation11], 4
      %s65 = int_to_ptr.vmem [resolvable:$true] %s64
      %70 = dma.hbm_to_vmem [thread:$0]  %s4, 256, %s65, [#allocation12], 64, 64, 4
    $region21: #{tpu_custom_call.1} parent=1 // pred_fallthru
      _
    // Predicated region
    $region22: #{tpu_custom_call.1} parent=1 // pred_check
      _
    $region23: #{tpu_custom_call.1} parent=1 // pred_check_branch
      %72 = sbr.rel (0) target = $region25
    $region24: #{tpu_custom_call.1} parent=1 // pred_region
      _
    $region25: #{tpu_custom_call.1} parent=1 // pred_fallthru
      _
    // Predicated region
    $region26: #{tpu_custom_call.1} parent=1 // pred_check
      _
    $region27: #{tpu_custom_call.1} parent=1 // pred_check_branch
      %74 = sbr.rel (0) target = $region29
    $region28: #{tpu_custom_call.1} parent=1 // pred_region
      %s76 = ssub.s32 256, 256
      %77 = vsyncadd [#allocation12], %s76
      %s78 = sshll.u32 [#allocation13], 4
      %s79 = int_to_ptr.vmem [resolvable:$true] %s78
      %84 = dma.hbm_to_vmem [thread:$0]  %s6, 256, %s79, [#allocation12], 64, 64, 4
    $region29: #{tpu_custom_call.1} parent=1 // pred_fallthru
      _
    // Predicated region
    $region30: #{tpu_custom_call.1} parent=1 // pred_check
      _
    $region31: #{tpu_custom_call.1} parent=1 // pred_check_branch
      %86 = sbr.rel (0) target = $region33
    $region32: #{tpu_custom_call.1} parent=1 // pred_region
      _
    $region33: #{tpu_custom_call.1} parent=1 // pred_fallthru
      _
    // Predicated region
    $region34: #{tpu_custom_call.1} parent=1 // pred_check
      _
    $region35: #{tpu_custom_call.1} parent=1 // pred_check_branch
      %88 = sbr.rel (0) target = $region37
    $region36: #{tpu_custom_call.1} parent=1 // pred_region
      _
    $region37: #{tpu_custom_call.1} parent=1 // pred_fallthru
      _
    // Predicated region
    $region38: #{tpu_custom_call.1} parent=1 // pred_check
      _
    $region39: #{tpu_custom_call.1} parent=1 // pred_check_branch
      %90 = sbr.rel (0) target = $region41
    $region40: #{tpu_custom_call.1} parent=1 // pred_region
      _
    $region41: #{tpu_custom_call.1} parent=1 // pred_fallthru
      _
    // Predicated region
    $region42: #{tpu_custom_call.1} parent=1 // pred_check
      _
    $region43: #{tpu_custom_call.1} parent=1 // pred_check_branch
      %92 = sbr.rel (0) target = $region45
    $region44: #{tpu_custom_call.1} parent=1 // pred_region
      _
    $region45: #{tpu_custom_call.1} parent=1 // pred_fallthru
      _
    // Predicated region
    $region46: #{tpu_custom_call.1} parent=1 // pred_check
      _
    $region47: #{tpu_custom_call.1} parent=1 // pred_check_branch
      %94 = sbr.rel (0) target = $region49
    $region48: #{tpu_custom_call.1} parent=1 // pred_region
      _
    $region49: #{tpu_custom_call.1} parent=1 // pred_fallthru
      _
    // Predicated region
    $region50: #{tpu_custom_call.1} parent=1 // pred_check
      _
    $region51: #{tpu_custom_call.1} parent=1 // pred_check_branch
      %96 = sbr.rel (0) target = $region53
    $region52: #{tpu_custom_call.1} parent=1 // pred_region
      %97 = dma.done [#allocation6], 512
    $region53: #{tpu_custom_call.1} parent=1 // pred_fallthru
      _
    // Predicated region
    $region54: #{tpu_custom_call.1} parent=1 // pred_check
      _
    $region55: #{tpu_custom_call.1} parent=1 // pred_check_branch
      %99 = sbr.rel (0) target = $region57
    $region56: #{tpu_custom_call.1} parent=1 // pred_region
      %100 = dma.done [#allocation9], 256
    $region57: #{tpu_custom_call.1} parent=1 // pred_fallthru
      _
    // Predicated region
    $region58: #{tpu_custom_call.1} parent=1 // pred_check
      _
    $region59: #{tpu_custom_call.1} parent=1 // pred_check_branch
      %102 = sbr.rel (0) target = $region61
    $region60: #{tpu_custom_call.1} parent=1 // pred_region
      %103 = dma.done [#allocation9], 256
    $region61: #{tpu_custom_call.1} parent=1 // pred_fallthru
      _
    // Predicated region
    $region62: #{tpu_custom_call.1} parent=1 // pred_check
      _
    $region63: #{tpu_custom_call.1} parent=1 // pred_check_branch
      %105 = sbr.rel (0) target = $region65
    $region64: #{tpu_custom_call.1} parent=1 // pred_region
      %106 = dma.done [#allocation12], 256
    $region65: #{tpu_custom_call.1} parent=1 // pred_fallthru
      _
    // Predicated region
    $region66: #{tpu_custom_call.1} parent=1 // pred_check
      _
    $region67: #{tpu_custom_call.1} parent=1 // pred_check_branch
      %108 = sbr.rel (0) target = $region69
    $region68: #{tpu_custom_call.1} parent=1 // pred_region
      %109 = dma.done [#allocation12], 256
    $region69: #{tpu_custom_call.1} parent=1 // pred_fallthru
      _
    %p111 = scmp.eq.s32.totalorder 0, 0
    // Predicated region
    $region70: #{tpu_custom_call.1} parent=1 // pred_check
      %p112 = pneg %p111
    $region71: #{tpu_custom_call.1} parent=1 // pred_check_branch
      %114 = sbr.rel (%p112) target = $region73
    $region72: #{tpu_custom_call.1} parent=1 // pred_region
      %v115 = vld [vmem:[#allocation8] sm:$0xff]
      %v116 = vld [vmem:[#allocation8 + $0x8] sm:$0xff]
      %v117 = vpack.c.bf16 %v116, %v115
      %v118 = vld [vmem:[#allocation11] sm:$0xf]
      %v119 = vld [vmem:[#allocation11 + $0x4] sm:$0xf]
      %v120 = vld [vmem:[#allocation11 + $0x8] sm:$0xf]
      %v121 = vld [vmem:[#allocation11 + $0xc] sm:$0xf]
      %v122 = vld [vmem:[%s5] sm:$0x1]
      %v124 = vlaneseq
      %v125 = vshrl.u32 %v124, 7
      %v126 = vsub.s32 0, %v125
      %v127 = vrot.slane %v122, %v126
      %v133 = vunpack.c.l.b16 %v118
      %v134 = vunpack.c.l.b16 %v119
      %v135 = vunpack.c.l.b16 %v120
      %v136 = vunpack.c.l.b16 %v121
      %v137 = vpack.c.b16 %v134, %v133
      %v138 = vpack.c.b16 %v136, %v135
      %vm141 = vcmask 261120
      %v143 = vsel %vm141, %v117, 0
      %145 = vmatprep.subr.bf16.mxu0 0
      %146 = vmatpush1.bf16.msra.mxu0 0
      %147 = vmatprep.subr.bf16.mxu0 0
      %148 = vmatpush1.bf16.msra.mxu0 0
      %149 = vmatprep.subr.bf16.mxu0 0
      %150 = vmatpush1.bf16.msra.mxu0 0
      %151 = vmatprep.subr.bf16.mxu0 0
      %152 = vmatpush1.bf16.msra.mxu0 0
      %153 = vmatprep.subr.bf16.mxu0 0
      %154 = vmatpush1.bf16.msra.mxu0 0
      %155 = vmatprep.subr.bf16.mxu0 0
      %156 = vmatpush1.bf16.msra.mxu0 0
      %157 = vmatprep.subr.bf16.mxu0 0
      %158 = vmatpush1.bf16.msra.mxu0 %v138
      %159 = vmatprep.subr.bf16.mxu0 0
      %160 = vmatpush1.bf16.msra.mxu0 %v137
      %161 = vmatprep.subr.bf16.mxu0 0
      %162 = vmatpush2.bf16.msra.mxu0 0
      %163 = vmatprep.subr.bf16.mxu0 0
      %164 = vmatpush2.bf16.msra.mxu0 0
      %165 = vmatprep.subr.bf16.mxu0 0
      %166 = vmatpush2.bf16.msra.mxu0 0
      %167 = vmatprep.subr.bf16.mxu0 0
      %168 = vmatpush2.bf16.msra.mxu0 0
      %169 = vmatprep.subr.bf16.mxu0 0
      %170 = vmatpush2.bf16.msra.mxu0 0
      %171 = vmatprep.subr.bf16.mxu0 0
      %172 = vmatpush2.bf16.msra.mxu0 0
      %173 = vmatprep.subr.bf16.mxu0 0
      %174 = vmatpush2.bf16.msra.mxu0 0
      %175 = vmatprep.subr.bf16.mxu0 0
      %176 = vmatpush2.bf16.msra.mxu0 0
      %177 = vmatprep.mubr.bf16.mxu0 0
      %178 = vmatmul.mubr.bf16.gmra.mxu0 %v143
      %v179 = vpop.f32.mrf.mxu0
      %v180 = vadd.f32 %v127, %v179
      %v181 = vpop.f32.mrf.mxu0
      %v182 = vpop.f32.mrf.mxu0
      %v183 = vadd.f32 %v127, %v182
      %v184 = vpop.f32.mrf.mxu0
      %185 = vdwg.mxu0
      %v186 = vpack.c.bf16 %v180, %v180
      %v187 = vpack.c.bf16 %v183, %v183
      %vm188 = vcmask 257024
      %189 = vst.msk [vmem:[#allocation2] sm:$0xf] %vm188, %v186
      %190 = vst.msk [vmem:[#allocation2 + $0x4] sm:$0xf] %vm188, %v187
      %v193 = vunpack.c.l.b16 %v186
      %v194 = vunpack.c.l.b16 %v187
      %v195 = vpack.c.b16 %v193, %v193
      %v196 = vpack.c.b16 %v194, %v194
      %197 = vrot.lane.b32.xlu0 %v195, 96
      %v198 = vpop.permute.xlu0 %197
      %199 = vrot.lane.b32.xlu0 %v196, 96
      %v200 = vpop.permute.xlu0 %199
      %203 = vst.msk [vmem:[#allocation3] sm:$0xf] %vm188, %v198
      %204 = vst.msk [vmem:[#allocation3 + $0x4] sm:$0xf] %vm188, %v200
    $region73: #{tpu_custom_call.1} parent=1 // pred_fallthru
      _
    %v205 = vld [vmem:[#allocation5] sm:$0xff]
    %v206 = vld [vmem:[#allocation5 + $0x8] sm:$0xff]
    %v207 = vld [vmem:[#allocation5 + $0x10] sm:$0xff]
    %v208 = vld [vmem:[#allocation5 + $0x18] sm:$0xff]
    %v209 = vpack.c.bf16 %v206, %v205
    %v210 = vpack.c.bf16 %v208, %v207
    %v211 = vld [vmem:[#allocation10] sm:$0xf]
    %v212 = vld [vmem:[#allocation10 + $0x4] sm:$0xf]
    %v213 = vld [vmem:[#allocation10 + $0x8] sm:$0xf]
    %v214 = vld [vmem:[#allocation10 + $0xc] sm:$0xf]
    %v215 = vld [vmem:[%s3] sm:$0x1]
    %v217 = vlaneseq
    %v218 = vshrl.u32 %v217, 7
    %v219 = vsub.s32 0, %v218
    %v220 = vrot.slane %v215, %v219
    %v226 = vunpack.c.l.b16 %v211
    %v227 = vunpack.c.l.b16 %v212
    %v228 = vunpack.c.l.b16 %v213
    %v229 = vunpack.c.l.b16 %v214
    %v230 = vpack.c.b16 %v227, %v226
    %v231 = vpack.c.b16 %v229, %v228
    %vm234 = vcmask 261120
    %v236 = vsel %vm234, %v209, 0
    %v239 = vsel %vm234, %v210, 0
    %241 = vmatprep.subr.bf16.mxu0 0
    %242 = vmatpush1.bf16.msra.mxu0 0
    %243 = vmatprep.subr.bf16.mxu0 0
    %244 = vmatpush1.bf16.msra.mxu0 0
    %245 = vmatprep.subr.bf16.mxu0 0
    %246 = vmatpush1.bf16.msra.mxu0 0
    %247 = vmatprep.subr.bf16.mxu0 0
    %248 = vmatpush1.bf16.msra.mxu0 0
    %249 = vmatprep.subr.bf16.mxu0 0
    %250 = vmatpush1.bf16.msra.mxu0 0
    %251 = vmatprep.subr.bf16.mxu0 0
    %252 = vmatpush1.bf16.msra.mxu0 0
    %253 = vmatprep.subr.bf16.mxu0 0
    %254 = vmatpush1.bf16.msra.mxu0 %v231
    %255 = vmatprep.subr.bf16.mxu0 0
    %256 = vmatpush1.bf16.msra.mxu0 %v230
    %257 = vmatprep.subr.bf16.mxu0 0
    %258 = vmatpush2.bf16.msra.mxu0 0
    %259 = vmatprep.subr.bf16.mxu0 0
    %260 = vmatpush2.bf16.msra.mxu0 0
    %261 = vmatprep.subr.bf16.mxu0 0
    %262 = vmatpush2.bf16.msra.mxu0 0
    %263 = vmatprep.subr.bf16.mxu0 0
    %264 = vmatpush2.bf16.msra.mxu0 0
    %265 = vmatprep.subr.bf16.mxu0 0
    %266 = vmatpush2.bf16.msra.mxu0 0
    %267 = vmatprep.subr.bf16.mxu0 0
    %268 = vmatpush2.bf16.msra.mxu0 0
    %269 = vmatprep.subr.bf16.mxu0 0
    %270 = vmatpush2.bf16.msra.mxu0 0
    %271 = vmatprep.subr.bf16.mxu0 0
    %272 = vmatpush2.bf16.msra.mxu0 0
    %273 = vmatprep.mubr.bf16.mxu0 0
    %274 = vmatmul.mubr.bf16.gmra.mxu0 %v236
    %v275 = vpop.f32.mrf.mxu0
    %v276 = vadd.f32 %v220, %v275
    %v277 = vpop.f32.mrf.mxu0
    %v278 = vpop.f32.mrf.mxu0
    %v279 = vadd.f32 %v220, %v278
    %v280 = vpop.f32.mrf.mxu0
    %281 = vmatprep.mubr.bf16.mxu0 0
    %282 = vmatmul.mubr.bf16.gmra.mxu0 %v239
    %v283 = vpop.f32.mrf.mxu0
    %v284 = vadd.f32 %v220, %v283
    %v285 = vpop.f32.mrf.mxu0
    %v286 = vpop.f32.mrf.mxu0
    %v287 = vadd.f32 %v220, %v286
    %v288 = vpop.f32.mrf.mxu0
    %289 = vdwg.mxu0
    %v290 = vpack.c.bf16 %v279, %v276
    %v291 = vpack.c.bf16 %v287, %v284
    %v292 = vld [vmem:[#allocation2] sm:$0xf]
    %v293 = vld [vmem:[#allocation2 + $0x4] sm:$0xf]
    %v294 = vld [vmem:[#allocation3] sm:$0xf]
    %v295 = vld [vmem:[#allocation3 + $0x4] sm:$0xf]
    %vm296 = vcmask 64512
    %v298 = vsel %vm296, %v290, 0
    %v301 = vsel %vm296, %v292, 0
    %303 = vmatprep.subr.bf16.mxu0 0
    %304 = vmatpush1.bf16.xpose.msra.mxu0 0
    %305 = vmatprep.subr.bf16.mxu0 0
    %306 = vmatpush1.bf16.xpose.msra.mxu0 0
    %307 = vmatprep.subr.bf16.mxu0 0
    %308 = vmatpush1.bf16.xpose.msra.mxu0 0
    %309 = vmatprep.subr.bf16.mxu0 0
    %310 = vmatpush1.bf16.xpose.msra.mxu0 0
    %311 = vmatprep.subr.bf16.mxu0 0
    %312 = vmatpush1.bf16.xpose.msra.mxu0 0
    %313 = vmatprep.subr.bf16.mxu0 0
    %314 = vmatpush1.bf16.xpose.msra.mxu0 0
    %315 = vmatprep.subr.bf16.mxu0 0
    %316 = vmatpush1.bf16.xpose.msra.mxu0 0
    %317 = vmatprep.subr.bf16.mxu0 0
    %318 = vmatpush1.bf16.xpose.msra.mxu0 %v301
    %319 = vmatprep.subr.bf16.mxu0 0
    %320 = vmatpush2.bf16.xpose.msra.mxu0 0
    %321 = vmatprep.subr.bf16.mxu0 0
    %322 = vmatpush2.bf16.xpose.msra.mxu0 0
    %323 = vmatprep.subr.bf16.mxu0 0
    %324 = vmatpush2.bf16.xpose.msra.mxu0 0
    %325 = vmatprep.subr.bf16.mxu0 0
    %326 = vmatpush2.bf16.xpose.msra.mxu0 0
    %327 = vmatprep.subr.bf16.mxu0 0
    %328 = vmatpush2.bf16.xpose.msra.mxu0 0
    %329 = vmatprep.subr.bf16.mxu0 0
    %330 = vmatpush2.bf16.xpose.msra.mxu0 0
    %331 = vmatprep.subr.bf16.mxu0 0
    %332 = vmatpush2.bf16.xpose.msra.mxu0 0
    %333 = vmatprep.subr.bf16.mxu0 0
    %334 = vmatpush2.bf16.xpose.msra.mxu0 0
    %335 = vmatprep.mubr.bf16.mxu0 0
    %336 = vmatmul.mubr.bf16.gmra.mxu0 %v298
    %v337 = vpop.f32.mrf.mxu0
    %v338 = vadd.f32 0.0, %v337
    %v339 = vpop.f32.mrf.mxu0
    %v340 = vpop.f32.mrf.mxu0
    %v341 = vadd.f32 0.0, %v340
    %v342 = vpop.f32.mrf.mxu0
    %343 = vdwg.mxu0
    %v345 = vsel %vm296, %v291, 0
    %v348 = vsel %vm296, %v293, 0
    %350 = vmatprep.subr.bf16.mxu0 0
    %351 = vmatpush1.bf16.xpose.msra.mxu0 0
    %352 = vmatprep.subr.bf16.mxu0 0
    %353 = vmatpush1.bf16.xpose.msra.mxu0 0
    %354 = vmatprep.subr.bf16.mxu0 0
    %355 = vmatpush1.bf16.xpose.msra.mxu0 0
    %356 = vmatprep.subr.bf16.mxu0 0
    %357 = vmatpush1.bf16.xpose.msra.mxu0 0
    %358 = vmatprep.subr.bf16.mxu0 0
    %359 = vmatpush1.bf16.xpose.msra.mxu0 0
    %360 = vmatprep.subr.bf16.mxu0 0
    %361 = vmatpush1.bf16.xpose.msra.mxu0 0
    %362 = vmatprep.subr.bf16.mxu0 0
    %363 = vmatpush1.bf16.xpose.msra.mxu0 0
    %364 = vmatprep.subr.bf16.mxu0 0
    %365 = vmatpush1.bf16.xpose.msra.mxu0 %v348
    %366 = vmatprep.subr.bf16.mxu0 0
    %367 = vmatpush2.bf16.xpose.msra.mxu0 0
    %368 = vmatprep.subr.bf16.mxu0 0
    %369 = vmatpush2.bf16.xpose.msra.mxu0 0
    %370 = vmatprep.subr.bf16.mxu0 0
    %371 = vmatpush2.bf16.xpose.msra.mxu0 0
    %372 = vmatprep.subr.bf16.mxu0 0
    %373 = vmatpush2.bf16.xpose.msra.mxu0 0
    %374 = vmatprep.subr.bf16.mxu0 0
    %375 = vmatpush2.bf16.xpose.msra.mxu0 0
    %376 = vmatprep.subr.bf16.mxu0 0
    %377 = vmatpush2.bf16.xpose.msra.mxu0 0
    %378 = vmatprep.subr.bf16.mxu0 0
    %379 = vmatpush2.bf16.xpose.msra.mxu0 0
    %380 = vmatprep.subr.bf16.mxu0 0
    %381 = vmatpush2.bf16.xpose.msra.mxu0 0
    %382 = vmatprep.mubr.bf16.mxu0 0
    %383 = vmatmul.mubr.bf16.gmra.mxu0 %v345
    %v384 = vpop.f32.mrf.mxu0
    %v385 = vadd.f32 0.0, %v384
    %v386 = vpop.f32.mrf.mxu0
    %v387 = vpop.f32.mrf.mxu0
    %v388 = vadd.f32 0.0, %v387
    %v389 = vpop.f32.mrf.mxu0
    %390 = vdwg.mxu0
    %v391 = vmul.f32 %v338, 0.35355338
    %v392 = vmul.f32 %v341, 0.35355338
    %v393 = vmul.f32 %v385, 0.35355338
    %v394 = vmul.f32 %v388, 0.35355338
    %v395 = vsel %vm296, %v391, -inf
    %396 = vmax.xlane.f32.xlu0 %v395
    %v397 = vpop.xlane.xlu0 %396
    %v398 = vsel %vm296, %v392, -inf
    %399 = vmax.xlane.f32.xlu0 %v398
    %v400 = vpop.xlane.xlu0 %399
    %v401 = vsel %vm296, %v393, -inf
    %402 = vmax.xlane.f32.xlu0 %v401
    %v403 = vpop.xlane.xlu0 %402
    %v404 = vsel %vm296, %v394, -inf
    %405 = vmax.xlane.f32.xlu0 %v404
    %v406 = vpop.xlane.xlu0 %405
    %v407 = vsub.f32 %v391, %v397
    %v408 = vsub.f32 %v392, %v400
    %v409 = vsub.f32 %v393, %v403
    %v410 = vsub.f32 %v394, %v406
    %v411 = vmul.f32 %v407, 1.442695
    %v412 = vpow.pop %v411
    %v413 = vmul.f32 %v408, 1.442695
    %v414 = vpow.pop %v413
    %v415 = vmul.f32 %v409, 1.442695
    %v416 = vpow.pop %v415
    %v417 = vmul.f32 %v410, 1.442695
    %v418 = vpow.pop %v417
    %v419 = vsel %vm296, %v412, 0.0
    %420 = vadd.xlane.f32.xlu0 %v419
    %v421 = vpop.xlane.xlu0 %420
    %v422 = vsel %vm296, %v414, 0.0
    %423 = vadd.xlane.f32.xlu0 %v422
    %v424 = vpop.xlane.xlu0 %423
    %v425 = vsel %vm296, %v416, 0.0
    %426 = vadd.xlane.f32.xlu0 %v425
    %v427 = vpop.xlane.xlu0 %426
    %v428 = vsel %vm296, %v418, 0.0
    %429 = vadd.xlane.f32.xlu0 %v428
    %v430 = vpop.xlane.xlu0 %429
    %v431 = vrcp.pop %v421
    %v432 = vrcp.pop %v424
    %v433 = vrcp.pop %v427
    %v434 = vrcp.pop %v430
    %v435 = vmul.f32 %v412, %v431
    %v436 = vmul.f32 %v414, %v432
    %v437 = vmul.f32 %v416, %v433
    %v438 = vmul.f32 %v418, %v434
    %v439 = vpack.c.bf16 %v436, %v435
    %v440 = vpack.c.bf16 %v438, %v437
    %v442 = vsel %vm296, %v439, 0
    %vm444 = vcmask 1043456
    %v446 = vsel %vm444, %v294, 0
    %448 = vmatprep.subr.bf16.mxu0 0
    %449 = vmatpush1.bf16.msra.mxu0 0
    %450 = vmatprep.subr.bf16.mxu0 0
    %451 = vmatpush1.bf16.msra.mxu0 0
    %452 = vmatprep.subr.bf16.mxu0 0
    %453 = vmatpush1.bf16.msra.mxu0 0
    %454 = vmatprep.subr.bf16.mxu0 0
    %455 = vmatpush1.bf16.msra.mxu0 0
    %456 = vmatprep.subr.bf16.mxu0 0
    %457 = vmatpush1.bf16.msra.mxu0 0
    %458 = vmatprep.subr.bf16.mxu0 0
    %459 = vmatpush1.bf16.msra.mxu0 0
    %460 = vmatprep.subr.bf16.mxu0 0
    %461 = vmatpush1.bf16.msra.mxu0 0
    %462 = vmatprep.subr.bf16.mxu0 0
    %463 = vmatpush1.bf16.msra.mxu0 %v446
    %464 = vmatprep.subr.bf16.mxu0 0
    %465 = vmatpush2.bf16.msra.mxu0 0
    %466 = vmatprep.subr.bf16.mxu0 0
    %467 = vmatpush2.bf16.msra.mxu0 0
    %468 = vmatprep.subr.bf16.mxu0 0
    %469 = vmatpush2.bf16.msra.mxu0 0
    %470 = vmatprep.subr.bf16.mxu0 0
    %471 = vmatpush2.bf16.msra.mxu0 0
    %472 = vmatprep.subr.bf16.mxu0 0
    %473 = vmatpush2.bf16.msra.mxu0 0
    %474 = vmatprep.subr.bf16.mxu0 0
    %475 = vmatpush2.bf16.msra.mxu0 0
    %476 = vmatprep.subr.bf16.mxu0 0
    %477 = vmatpush2.bf16.msra.mxu0 0
    %478 = vmatprep.subr.bf16.mxu0 0
    %479 = vmatpush2.bf16.msra.mxu0 0
    %480 = vmatprep.mubr.bf16.mxu0 0
    %481 = vmatmul.mubr.bf16.gmra.mxu0 %v442
    %v482 = vpop.f32.mrf.mxu0
    %v483 = vadd.f32 0.0, %v482
    %v484 = vpop.f32.mrf.mxu0
    %v485 = vpop.f32.mrf.mxu0
    %v486 = vadd.f32 0.0, %v485
    %v487 = vpop.f32.mrf.mxu0
    %488 = vdwg.mxu0
    %v490 = vsel %vm296, %v440, 0
    %v493 = vsel %vm444, %v295, 0
    %495 = vmatprep.subr.bf16.mxu0 0
    %496 = vmatpush1.bf16.msra.mxu0 0
    %497 = vmatprep.subr.bf16.mxu0 0
    %498 = vmatpush1.bf16.msra.mxu0 0
    %499 = vmatprep.subr.bf16.mxu0 0
    %500 = vmatpush1.bf16.msra.mxu0 0
    %501 = vmatprep.subr.bf16.mxu0 0
    %502 = vmatpush1.bf16.msra.mxu0 0
    %503 = vmatprep.subr.bf16.mxu0 0
    %504 = vmatpush1.bf16.msra.mxu0 0
    %505 = vmatprep.subr.bf16.mxu0 0
    %506 = vmatpush1.bf16.msra.mxu0 0
    %507 = vmatprep.subr.bf16.mxu0 0
    %508 = vmatpush1.bf16.msra.mxu0 0
    %509 = vmatprep.subr.bf16.mxu0 0
    %510 = vmatpush1.bf16.msra.mxu0 %v493
    %511 = vmatprep.subr.bf16.mxu0 0
    %512 = vmatpush2.bf16.msra.mxu0 0
    %513 = vmatprep.subr.bf16.mxu0 0
    %514 = vmatpush2.bf16.msra.mxu0 0
    %515 = vmatprep.subr.bf16.mxu0 0
    %516 = vmatpush2.bf16.msra.mxu0 0
    %517 = vmatprep.subr.bf16.mxu0 0
    %518 = vmatpush2.bf16.msra.mxu0 0
    %519 = vmatprep.subr.bf16.mxu0 0
    %520 = vmatpush2.bf16.msra.mxu0 0
    %521 = vmatprep.subr.bf16.mxu0 0
    %522 = vmatpush2.bf16.msra.mxu0 0
    %523 = vmatprep.subr.bf16.mxu0 0
    %524 = vmatpush2.bf16.msra.mxu0 0
    %525 = vmatprep.subr.bf16.mxu0 0
    %526 = vmatpush2.bf16.msra.mxu0 0
    %527 = vmatprep.mubr.bf16.mxu0 0
    %528 = vmatmul.mubr.bf16.gmra.mxu0 %v490
    %v529 = vpop.f32.mrf.mxu0
    %v530 = vadd.f32 0.0, %v529
    %v531 = vpop.f32.mrf.mxu0
    %v532 = vpop.f32.mrf.mxu0
    %v533 = vadd.f32 0.0, %v532
    %v534 = vpop.f32.mrf.mxu0
    %535 = vdwg.mxu0
    %536 = vst.msk [vmem:[#allocation4] sm:$0xff] %vm296, %v483
    %537 = vst.msk [vmem:[#allocation4 + $0x8] sm:$0xff] %vm296, %v486
    %538 = vst.msk [vmem:[#allocation4 + $0x10] sm:$0xff] %vm296, %v530
    %539 = vst.msk [vmem:[#allocation4 + $0x18] sm:$0xff] %vm296, %v533
    %541 = vrot.lane.b32.xlu0 %v290, 120
    %v542 = vpop.permute.xlu0 %541
    %v544 = vunpack.c.l.b16 %v292
    %v545 = vpack.c.b16 %v544, %v544
    %546 = vrot.lane.b32.xlu0 %v545, 120
    %v547 = vpop.permute.xlu0 %546
    %v549 = vsel %vm296, %v542, 0
    %v552 = vsel %vm296, %v547, 0
    %554 = vmatprep.subr.bf16.mxu0 0
    %555 = vmatpush1.bf16.xpose.msra.mxu0 0
    %556 = vmatprep.subr.bf16.mxu0 0
    %557 = vmatpush1.bf16.xpose.msra.mxu0 0
    %558 = vmatprep.subr.bf16.mxu0 0
    %559 = vmatpush1.bf16.xpose.msra.mxu0 0
    %560 = vmatprep.subr.bf16.mxu0 0
    %561 = vmatpush1.bf16.xpose.msra.mxu0 0
    %562 = vmatprep.subr.bf16.mxu0 0
    %563 = vmatpush1.bf16.xpose.msra.mxu0 0
    %564 = vmatprep.subr.bf16.mxu0 0
    %565 = vmatpush1.bf16.xpose.msra.mxu0 0
    %566 = vmatprep.subr.bf16.mxu0 0
    %567 = vmatpush1.bf16.xpose.msra.mxu0 0
    %568 = vmatprep.subr.bf16.mxu0 0
    %569 = vmatpush1.bf16.xpose.msra.mxu0 %v552
    %570 = vmatprep.subr.bf16.mxu0 0
    %571 = vmatpush2.bf16.xpose.msra.mxu0 0
    %572 = vmatprep.subr.bf16.mxu0 0
    %573 = vmatpush2.bf16.xpose.msra.mxu0 0
    %574 = vmatprep.subr.bf16.mxu0 0
    %575 = vmatpush2.bf16.xpose.msra.mxu0 0
    %576 = vmatprep.subr.bf16.mxu0 0
    %577 = vmatpush2.bf16.xpose.msra.mxu0 0
    %578 = vmatprep.subr.bf16.mxu0 0
    %579 = vmatpush2.bf16.xpose.msra.mxu0 0
    %580 = vmatprep.subr.bf16.mxu0 0
    %581 = vmatpush2.bf16.xpose.msra.mxu0 0
    %582 = vmatprep.subr.bf16.mxu0 0
    %583 = vmatpush2.bf16.xpose.msra.mxu0 0
    %584 = vmatprep.subr.bf16.mxu0 0
    %585 = vmatpush2.bf16.xpose.msra.mxu0 0
    %586 = vmatprep.mubr.bf16.mxu0 0
    %587 = vmatmul.mubr.bf16.gmra.mxu0 %v549
    %v588 = vpop.f32.mrf.mxu0
    %v589 = vadd.f32 0.0, %v588
    %v590 = vpop.f32.mrf.mxu0
    %v591 = vpop.f32.mrf.mxu0
    %v592 = vadd.f32 0.0, %v591
    %v593 = vpop.f32.mrf.mxu0
    %594 = vdwg.mxu0
    %596 = vrot.lane.b32.xlu0 %v291, 120
    %v597 = vpop.permute.xlu0 %596
    %v599 = vunpack.c.l.b16 %v293
    %v600 = vpack.c.b16 %v599, %v599
    %601 = vrot.lane.b32.xlu0 %v600, 120
    %v602 = vpop.permute.xlu0 %601
    %v604 = vsel %vm296, %v597, 0
    %v607 = vsel %vm296, %v602, 0
    %609 = vmatprep.subr.bf16.mxu0 0
    %610 = vmatpush1.bf16.xpose.msra.mxu0 0
    %611 = vmatprep.subr.bf16.mxu0 0
    %612 = vmatpush1.bf16.xpose.msra.mxu0 0
    %613 = vmatprep.subr.bf16.mxu0 0
    %614 = vmatpush1.bf16.xpose.msra.mxu0 0
    %615 = vmatprep.subr.bf16.mxu0 0
    %616 = vmatpush1.bf16.xpose.msra.mxu0 0
    %617 = vmatprep.subr.bf16.mxu0 0
    %618 = vmatpush1.bf16.xpose.msra.mxu0 0
    %619 = vmatprep.subr.bf16.mxu0 0
    %620 = vmatpush1.bf16.xpose.msra.mxu0 0
    %621 = vmatprep.subr.bf16.mxu0 0
    %622 = vmatpush1.bf16.xpose.msra.mxu0 0
    %623 = vmatprep.subr.bf16.mxu0 0
    %624 = vmatpush1.bf16.xpose.msra.mxu0 %v607
    %625 = vmatprep.subr.bf16.mxu0 0
    %626 = vmatpush2.bf16.xpose.msra.mxu0 0
    %627 = vmatprep.subr.bf16.mxu0 0
    %628 = vmatpush2.bf16.xpose.msra.mxu0 0
    %629 = vmatprep.subr.bf16.mxu0 0
    %630 = vmatpush2.bf16.xpose.msra.mxu0 0
    %631 = vmatprep.subr.bf16.mxu0 0
    %632 = vmatpush2.bf16.xpose.msra.mxu0 0
    %633 = vmatprep.subr.bf16.mxu0 0
    %634 = vmatpush2.bf16.xpose.msra.mxu0 0
    %635 = vmatprep.subr.bf16.mxu0 0
    %636 = vmatpush2.bf16.xpose.msra.mxu0 0
    %637 = vmatprep.subr.bf16.mxu0 0
    %638 = vmatpush2.bf16.xpose.msra.mxu0 0
    %639 = vmatprep.subr.bf16.mxu0 0
    %640 = vmatpush2.bf16.xpose.msra.mxu0 0
    %641 = vmatprep.mubr.bf16.mxu0 0
    %642 = vmatmul.mubr.bf16.gmra.mxu0 %v604
    %v643 = vpop.f32.mrf.mxu0
    %v644 = vadd.f32 0.0, %v643
    %v645 = vpop.f32.mrf.mxu0
    %v646 = vpop.f32.mrf.mxu0
    %v647 = vadd.f32 0.0, %v646
    %v648 = vpop.f32.mrf.mxu0
    %649 = vdwg.mxu0
    %v650 = vmul.f32 %v589, 0.35355338
    %v651 = vmul.f32 %v592, 0.35355338
    %v652 = vmul.f32 %v644, 0.35355338
    %v653 = vmul.f32 %v647, 0.35355338
    %v654 = vsel %vm296, %v650, -inf
    %655 = vmax.xlane.f32.xlu0 %v654
    %v656 = vpop.xlane.xlu0 %655
    %v657 = vsel %vm296, %v651, -inf
    %658 = vmax.xlane.f32.xlu0 %v657
    %v659 = vpop.xlane.xlu0 %658
    %v660 = vsel %vm296, %v652, -inf
    %661 = vmax.xlane.f32.xlu0 %v660
    %v662 = vpop.xlane.xlu0 %661
    %v663 = vsel %vm296, %v653, -inf
    %664 = vmax.xlane.f32.xlu0 %v663
    %v665 = vpop.xlane.xlu0 %664
    %v666 = vsub.f32 %v650, %v656
    %v667 = vsub.f32 %v651, %v659
    %v668 = vsub.f32 %v652, %v662
    %v669 = vsub.f32 %v653, %v665
    %v670 = vmul.f32 %v666, 1.442695
    %v671 = vpow.pop %v670
    %v672 = vmul.f32 %v667, 1.442695
    %v673 = vpow.pop %v672
    %v674 = vmul.f32 %v668, 1.442695
    %v675 = vpow.pop %v674
    %v676 = vmul.f32 %v669, 1.442695
    %v677 = vpow.pop %v676
    %v678 = vsel %vm296, %v671, 0.0
    %679 = vadd.xlane.f32.xlu0 %v678
    %v680 = vpop.xlane.xlu0 %679
    %v681 = vsel %vm296, %v673, 0.0
    %682 = vadd.xlane.f32.xlu0 %v681
    %v683 = vpop.xlane.xlu0 %682
    %v684 = vsel %vm296, %v675, 0.0
    %685 = vadd.xlane.f32.xlu0 %v684
    %v686 = vpop.xlane.xlu0 %685
    %v687 = vsel %vm296, %v677, 0.0
    %688 = vadd.xlane.f32.xlu0 %v687
    %v689 = vpop.xlane.xlu0 %688
    %v690 = vrcp.pop %v680
    %v691 = vrcp.pop %v683
    %v692 = vrcp.pop %v686
    %v693 = vrcp.pop %v689
    %v694 = vmul.f32 %v671, %v690
    %v695 = vmul.f32 %v673, %v691
    %v696 = vmul.f32 %v675, %v692
    %v697 = vmul.f32 %v677, %v693
    %v698 = vpack.c.bf16 %v695, %v694
    %v699 = vpack.c.bf16 %v697, %v696
    %v701 = vunpack.c.l.b16 %v294
    %v702 = vpack.c.b16 %v701, %v701
    %703 = vrot.lane.b32.xlu0 %v702, 120
    %v704 = vpop.permute.xlu0 %703
    %v706 = vsel %vm296, %v698, 0
    %v709 = vsel %vm444, %v704, 0
    %711 = vmatprep.subr.bf16.mxu0 0
    %712 = vmatpush1.bf16.msra.mxu0 0
    %713 = vmatprep.subr.bf16.mxu0 0
    %714 = vmatpush1.bf16.msra.mxu0 0
    %715 = vmatprep.subr.bf16.mxu0 0
    %716 = vmatpush1.bf16.msra.mxu0 0
    %717 = vmatprep.subr.bf16.mxu0 0
    %718 = vmatpush1.bf16.msra.mxu0 0
    %719 = vmatprep.subr.bf16.mxu0 0
    %720 = vmatpush1.bf16.msra.mxu0 0
    %721 = vmatprep.subr.bf16.mxu0 0
    %722 = vmatpush1.bf16.msra.mxu0 0
    %723 = vmatprep.subr.bf16.mxu0 0
    %724 = vmatpush1.bf16.msra.mxu0 0
    %725 = vmatprep.subr.bf16.mxu0 0
    %726 = vmatpush1.bf16.msra.mxu0 %v709
    %727 = vmatprep.subr.bf16.mxu0 0
    %728 = vmatpush2.bf16.msra.mxu0 0
    %729 = vmatprep.subr.bf16.mxu0 0
    %730 = vmatpush2.bf16.msra.mxu0 0
    %731 = vmatprep.subr.bf16.mxu0 0
    %732 = vmatpush2.bf16.msra.mxu0 0
    %733 = vmatprep.subr.bf16.mxu0 0
    %734 = vmatpush2.bf16.msra.mxu0 0
    %735 = vmatprep.subr.bf16.mxu0 0
    %736 = vmatpush2.bf16.msra.mxu0 0
    %737 = vmatprep.subr.bf16.mxu0 0
    %738 = vmatpush2.bf16.msra.mxu0 0
    %739 = vmatprep.subr.bf16.mxu0 0
    %740 = vmatpush2.bf16.msra.mxu0 0
    %741 = vmatprep.subr.bf16.mxu0 0
    %742 = vmatpush2.bf16.msra.mxu0 0
    %743 = vmatprep.mubr.bf16.mxu0 0
    %744 = vmatmul.mubr.bf16.gmra.mxu0 %v706
    %v745 = vpop.f32.mrf.mxu0
    %v746 = vadd.f32 0.0, %v745
    %v747 = vpop.f32.mrf.mxu0
    %v748 = vpop.f32.mrf.mxu0
    %v749 = vadd.f32 0.0, %v748
    %v750 = vpop.f32.mrf.mxu0
    %751 = vdwg.mxu0
    %v753 = vunpack.c.l.b16 %v295
    %v754 = vpack.c.b16 %v753, %v753
    %755 = vrot.lane.b32.xlu0 %v754, 120
    %v756 = vpop.permute.xlu0 %755
    %v758 = vsel %vm296, %v699, 0
    %v761 = vsel %vm444, %v756, 0
    %763 = vmatprep.subr.bf16.mxu0 0
    %764 = vmatpush1.bf16.msra.mxu0 0
    %765 = vmatprep.subr.bf16.mxu0 0
    %766 = vmatpush1.bf16.msra.mxu0 0
    %767 = vmatprep.subr.bf16.mxu0 0
    %768 = vmatpush1.bf16.msra.mxu0 0
    %769 = vmatprep.subr.bf16.mxu0 0
    %770 = vmatpush1.bf16.msra.mxu0 0
    %771 = vmatprep.subr.bf16.mxu0 0
    %772 = vmatpush1.bf16.msra.mxu0 0
    %773 = vmatprep.subr.bf16.mxu0 0
    %774 = vmatpush1.bf16.msra.mxu0 0
    %775 = vmatprep.subr.bf16.mxu0 0
    %776 = vmatpush1.bf16.msra.mxu0 0
    %777 = vmatprep.subr.bf16.mxu0 0
    %778 = vmatpush1.bf16.msra.mxu0 %v761
    %779 = vmatprep.subr.bf16.mxu0 0
    %780 = vmatpush2.bf16.msra.mxu0 0
    %781 = vmatprep.subr.bf16.mxu0 0
    %782 = vmatpush2.bf16.msra.mxu0 0
    %783 = vmatprep.subr.bf16.mxu0 0
    %784 = vmatpush2.bf16.msra.mxu0 0
    %785 = vmatprep.subr.bf16.mxu0 0
    %786 = vmatpush2.bf16.msra.mxu0 0
    %787 = vmatprep.subr.bf16.mxu0 0
    %788 = vmatpush2.bf16.msra.mxu0 0
    %789 = vmatprep.subr.bf16.mxu0 0
    %790 = vmatpush2.bf16.msra.mxu0 0
    %791 = vmatprep.subr.bf16.mxu0 0
    %792 = vmatpush2.bf16.msra.mxu0 0
    %793 = vmatprep.subr.bf16.mxu0 0
    %794 = vmatpush2.bf16.msra.mxu0 0
    %795 = vmatprep.mubr.bf16.mxu0 0
    %796 = vmatmul.mubr.bf16.gmra.mxu0 %v758
    %v797 = vpop.f32.mrf.mxu0
    %v798 = vadd.f32 0.0, %v797
    %v799 = vpop.f32.mrf.mxu0
    %v800 = vpop.f32.mrf.mxu0
    %v801 = vadd.f32 0.0, %v800
    %v802 = vpop.f32.mrf.mxu0
    %803 = vdwg.mxu0
    %808 = vrot.lane.b32.xlu0 %v746, 8
    %v809 = vpop.permute.xlu0 %808
    %810 = vrot.lane.b32.xlu0 %v749, 8
    %v811 = vpop.permute.xlu0 %810
    %812 = vrot.lane.b32.xlu0 %v798, 8
    %v813 = vpop.permute.xlu0 %812
    %814 = vrot.lane.b32.xlu0 %v801, 8
    %v815 = vpop.permute.xlu0 %814
    %vm820 = vcmask 130112
    %821 = vst.msk [vmem:[#allocation4] sm:$0xff] %vm820, %v809
    %822 = vst.msk [vmem:[#allocation4 + $0x8] sm:$0xff] %vm820, %v811
    %823 = vst.msk [vmem:[#allocation4 + $0x10] sm:$0xff] %vm820, %v813
    %824 = vst.msk [vmem:[#allocation4 + $0x18] sm:$0xff] %vm820, %v815
    %825 = vrot.lane.b32.xlu0 %v290, 112
    %v826 = vpop.permute.xlu0 %825
    %827 = vrot.lane.b32.xlu0 %v545, 112
    %v828 = vpop.permute.xlu0 %827
    %v830 = vsel %vm296, %v826, 0
    %v833 = vsel %vm296, %v828, 0
    %835 = vmatprep.subr.bf16.mxu0 0
    %836 = vmatpush1.bf16.xpose.msra.mxu0 0
    %837 = vmatprep.subr.bf16.mxu0 0
    %838 = vmatpush1.bf16.xpose.msra.mxu0 0
    %839 = vmatprep.subr.bf16.mxu0 0
    %840 = vmatpush1.bf16.xpose.msra.mxu0 0
    %841 = vmatprep.subr.bf16.mxu0 0
    %842 = vmatpush1.bf16.xpose.msra.mxu0 0
    %843 = vmatprep.subr.bf16.mxu0 0
    %844 = vmatpush1.bf16.xpose.msra.mxu0 0
    %845 = vmatprep.subr.bf16.mxu0 0
    %846 = vmatpush1.bf16.xpose.msra.mxu0 0
    %847 = vmatprep.subr.bf16.mxu0 0
    %848 = vmatpush1.bf16.xpose.msra.mxu0 0
    %849 = vmatprep.subr.bf16.mxu0 0
    %850 = vmatpush1.bf16.xpose.msra.mxu0 %v833
    %851 = vmatprep.subr.bf16.mxu0 0
    %852 = vmatpush2.bf16.xpose.msra.mxu0 0
    %853 = vmatprep.subr.bf16.mxu0 0
    %854 = vmatpush2.bf16.xpose.msra.mxu0 0
    %855 = vmatprep.subr.bf16.mxu0 0
    %856 = vmatpush2.bf16.xpose.msra.mxu0 0
    %857 = vmatprep.subr.bf16.mxu0 0
    %858 = vmatpush2.bf16.xpose.msra.mxu0 0
    %859 = vmatprep.subr.bf16.mxu0 0
    %860 = vmatpush2.bf16.xpose.msra.mxu0 0
    %861 = vmatprep.subr.bf16.mxu0 0
    %862 = vmatpush2.bf16.xpose.msra.mxu0 0
    %863 = vmatprep.subr.bf16.mxu0 0
    %864 = vmatpush2.bf16.xpose.msra.mxu0 0
    %865 = vmatprep.subr.bf16.mxu0 0
    %866 = vmatpush2.bf16.xpose.msra.mxu0 0
    %867 = vmatprep.mubr.bf16.mxu0 0
    %868 = vmatmul.mubr.bf16.gmra.mxu0 %v830
    %v869 = vpop.f32.mrf.mxu0
    %v870 = vadd.f32 0.0, %v869
    %v871 = vpop.f32.mrf.mxu0
    %v872 = vpop.f32.mrf.mxu0
    %v873 = vadd.f32 0.0, %v872
    %v874 = vpop.f32.mrf.mxu0
    %875 = vdwg.mxu0
    %876 = vrot.lane.b32.xlu0 %v291, 112
    %v877 = vpop.permute.xlu0 %876
    %878 = vrot.lane.b32.xlu0 %v600, 112
    %v879 = vpop.permute.xlu0 %878
    %v881 = vsel %vm296, %v877, 0
    %v884 = vsel %vm296, %v879, 0
    %886 = vmatprep.subr.bf16.mxu0 0
    %887 = vmatpush1.bf16.xpose.msra.mxu0 0
    %888 = vmatprep.subr.bf16.mxu0 0
    %889 = vmatpush1.bf16.xpose.msra.mxu0 0
    %890 = vmatprep.subr.bf16.mxu0 0
    %891 = vmatpush1.bf16.xpose.msra.mxu0 0
    %892 = vmatprep.subr.bf16.mxu0 0
    %893 = vmatpush1.bf16.xpose.msra.mxu0 0
    %894 = vmatprep.subr.bf16.mxu0 0
    %895 = vmatpush1.bf16.xpose.msra.mxu0 0
    %896 = vmatprep.subr.bf16.mxu0 0
    %897 = vmatpush1.bf16.xpose.msra.mxu0 0
    %898 = vmatprep.subr.bf16.mxu0 0
    %899 = vmatpush1.bf16.xpose.msra.mxu0 0
    %900 = vmatprep.subr.bf16.mxu0 0
    %901 = vmatpush1.bf16.xpose.msra.mxu0 %v884
    %902 = vmatprep.subr.bf16.mxu0 0
    %903 = vmatpush2.bf16.xpose.msra.mxu0 0
    %904 = vmatprep.subr.bf16.mxu0 0
    %905 = vmatpush2.bf16.xpose.msra.mxu0 0
    %906 = vmatprep.subr.bf16.mxu0 0
    %907 = vmatpush2.bf16.xpose.msra.mxu0 0
    %908 = vmatprep.subr.bf16.mxu0 0
    %909 = vmatpush2.bf16.xpose.msra.mxu0 0
    %910 = vmatprep.subr.bf16.mxu0 0
    %911 = vmatpush2.bf16.xpose.msra.mxu0 0
    %912 = vmatprep.subr.bf16.mxu0 0
    %913 = vmatpush2.bf16.xpose.msra.mxu0 0
    %914 = vmatprep.subr.bf16.mxu0 0
    %915 = vmatpush2.bf16.xpose.msra.mxu0 0
    %916 = vmatprep.subr.bf16.mxu0 0
    %917 = vmatpush2.bf16.xpose.msra.mxu0 0
    %918 = vmatprep.mubr.bf16.mxu0 0
    %919 = vmatmul.mubr.bf16.gmra.mxu0 %v881
    %v920 = vpop.f32.mrf.mxu0
    %v921 = vadd.f32 0.0, %v920
    %v922 = vpop.f32.mrf.mxu0
    %v923 = vpop.f32.mrf.mxu0
    %v924 = vadd.f32 0.0, %v923
    %v925 = vpop.f32.mrf.mxu0
    %926 = vdwg.mxu0
    %v927 = vmul.f32 %v870, 0.35355338
    %v928 = vmul.f32 %v873, 0.35355338
    %v929 = vmul.f32 %v921, 0.35355338
    %v930 = vmul.f32 %v924, 0.35355338
    %v931 = vsel %vm296, %v927, -inf
    %932 = vmax.xlane.f32.xlu0 %v931
    %v933 = vpop.xlane.xlu0 %932
    %v934 = vsel %vm296, %v928, -inf
    %935 = vmax.xlane.f32.xlu0 %v934
    %v936 = vpop.xlane.xlu0 %935
    %v937 = vsel %vm296, %v929, -inf
    %938 = vmax.xlane.f32.xlu0 %v937
    %v939 = vpop.xlane.xlu0 %938
    %v940 = vsel %vm296, %v930, -inf
    %941 = vmax.xlane.f32.xlu0 %v940
    %v942 = vpop.xlane.xlu0 %941
    %v943 = vsub.f32 %v927, %v933
    %v944 = vsub.f32 %v928, %v936
    %v945 = vsub.f32 %v929, %v939
    %v946 = vsub.f32 %v930, %v942
    %v947 = vmul.f32 %v943, 1.442695
    %v948 = vpow.pop %v947
    %v949 = vmul.f32 %v944, 1.442695
    %v950 = vpow.pop %v949
    %v951 = vmul.f32 %v945, 1.442695
    %v952 = vpow.pop %v951
    %v953 = vmul.f32 %v946, 1.442695
    %v954 = vpow.pop %v953
    %v955 = vsel %vm296, %v948, 0.0
    %956 = vadd.xlane.f32.xlu0 %v955
    %v957 = vpop.xlane.xlu0 %956
    %v958 = vsel %vm296, %v950, 0.0
    %959 = vadd.xlane.f32.xlu0 %v958
    %v960 = vpop.xlane.xlu0 %959
    %v961 = vsel %vm296, %v952, 0.0
    %962 = vadd.xlane.f32.xlu0 %v961
    %v963 = vpop.xlane.xlu0 %962
    %v964 = vsel %vm296, %v954, 0.0
    %965 = vadd.xlane.f32.xlu0 %v964
    %v966 = vpop.xlane.xlu0 %965
    %v967 = vrcp.pop %v957
    %v968 = vrcp.pop %v960
    %v969 = vrcp.pop %v963
    %v970 = vrcp.pop %v966
    %v971 = vmul.f32 %v948, %v967
    %v972 = vmul.f32 %v950, %v968
    %v973 = vmul.f32 %v952, %v969
    %v974 = vmul.f32 %v954, %v970
    %v975 = vpack.c.bf16 %v972, %v971
    %v976 = vpack.c.bf16 %v974, %v973
    %977 = vrot.lane.b32.xlu0 %v702, 112
    %v978 = vpop.permute.xlu0 %977
    %v980 = vsel %vm296, %v975, 0
    %v983 = vsel %vm444, %v978, 0
    %985 = vmatprep.subr.bf16.mxu0 0
    %986 = vmatpush1.bf16.msra.mxu0 0
    %987 = vmatprep.subr.bf16.mxu0 0
    %988 = vmatpush1.bf16.msra.mxu0 0
    %989 = vmatprep.subr.bf16.mxu0 0
    %990 = vmatpush1.bf16.msra.mxu0 0
    %991 = vmatprep.subr.bf16.mxu0 0
    %992 = vmatpush1.bf16.msra.mxu0 0
    %993 = vmatprep.subr.bf16.mxu0 0
    %994 = vmatpush1.bf16.msra.mxu0 0
    %995 = vmatprep.subr.bf16.mxu0 0
    %996 = vmatpush1.bf16.msra.mxu0 0
    %997 = vmatprep.subr.bf16.mxu0 0
    %998 = vmatpush1.bf16.msra.mxu0 0
    %999 = vmatprep.subr.bf16.mxu0 0
    %1000 = vmatpush1.bf16.msra.mxu0 %v983
    %1001 = vmatprep.subr.bf16.mxu0 0
    %1002 = vmatpush2.bf16.msra.mxu0 0
    %1003 = vmatprep.subr.bf16.mxu0 0
    %1004 = vmatpush2.bf16.msra.mxu0 0
    %1005 = vmatprep.subr.bf16.mxu0 0
    %1006 = vmatpush2.bf16.msra.mxu0 0
    %1007 = vmatprep.subr.bf16.mxu0 0
    %1008 = vmatpush2.bf16.msra.mxu0 0
    %1009 = vmatprep.subr.bf16.mxu0 0
    %1010 = vmatpush2.bf16.msra.mxu0 0
    %1011 = vmatprep.subr.bf16.mxu0 0
    %1012 = vmatpush2.bf16.msra.mxu0 0
    %1013 = vmatprep.subr.bf16.mxu0 0
    %1014 = vmatpush2.bf16.msra.mxu0 0
    %1015 = vmatprep.subr.bf16.mxu0 0
    %1016 = vmatpush2.bf16.msra.mxu0 0
    %1017 = vmatprep.mubr.bf16.mxu0 0
    %1018 = vmatmul.mubr.bf16.gmra.mxu0 %v980
    %v1019 = vpop.f32.mrf.mxu0
    %v1020 = vadd.f32 0.0, %v1019
    %v1021 = vpop.f32.mrf.mxu0
    %v1022 = vpop.f32.mrf.mxu0
    %v1023 = vadd.f32 0.0, %v1022
    %v1024 = vpop.f32.mrf.mxu0
    %1025 = vdwg.mxu0
    %1026 = vrot.lane.b32.xlu0 %v754, 112
    %v1027 = vpop.permute.xlu0 %1026
    %v1029 = vsel %vm296, %v976, 0
    %v1032 = vsel %vm444, %v1027, 0
    %1034 = vmatprep.subr.bf16.mxu0 0
    %1035 = vmatpush1.bf16.msra.mxu0 0
    %1036 = vmatprep.subr.bf16.mxu0 0
    %1037 = vmatpush1.bf16.msra.mxu0 0
    %1038 = vmatprep.subr.bf16.mxu0 0
    %1039 = vmatpush1.bf16.msra.mxu0 0
    %1040 = vmatprep.subr.bf16.mxu0 0
    %1041 = vmatpush1.bf16.msra.mxu0 0
    %1042 = vmatprep.subr.bf16.mxu0 0
    %1043 = vmatpush1.bf16.msra.mxu0 0
    %1044 = vmatprep.subr.bf16.mxu0 0
    %1045 = vmatpush1.bf16.msra.mxu0 0
    %1046 = vmatprep.subr.bf16.mxu0 0
    %1047 = vmatpush1.bf16.msra.mxu0 0
    %1048 = vmatprep.subr.bf16.mxu0 0
    %1049 = vmatpush1.bf16.msra.mxu0 %v1032
    %1050 = vmatprep.subr.bf16.mxu0 0
    %1051 = vmatpush2.bf16.msra.mxu0 0
    %1052 = vmatprep.subr.bf16.mxu0 0
    %1053 = vmatpush2.bf16.msra.mxu0 0
    %1054 = vmatprep.subr.bf16.mxu0 0
    %1055 = vmatpush2.bf16.msra.mxu0 0
    %1056 = vmatprep.subr.bf16.mxu0 0
    %1057 = vmatpush2.bf16.msra.mxu0 0
    %1058 = vmatprep.subr.bf16.mxu0 0
    %1059 = vmatpush2.bf16.msra.mxu0 0
    %1060 = vmatprep.subr.bf16.mxu0 0
    %1061 = vmatpush2.bf16.msra.mxu0 0
    %1062 = vmatprep.subr.bf16.mxu0 0
    %1063 = vmatpush2.bf16.msra.mxu0 0
    %1064 = vmatprep.subr.bf16.mxu0 0
    %1065 = vmatpush2.bf16.msra.mxu0 0
    %1066 = vmatprep.mubr.bf16.mxu0 0
    %1067 = vmatmul.mubr.bf16.gmra.mxu0 %v1029
    %v1068 = vpop.f32.mrf.mxu0
    %v1069 = vadd.f32 0.0, %v1068
    %v1070 = vpop.f32.mrf.mxu0
    %v1071 = vpop.f32.mrf.mxu0
    %v1072 = vadd.f32 0.0, %v1071
    %v1073 = vpop.f32.mrf.mxu0
    %1074 = vdwg.mxu0
    %1079 = vrot.lane.b32.xlu0 %v1020, 16
    %v1080 = vpop.permute.xlu0 %1079
    %1081 = vrot.lane.b32.xlu0 %v1023, 16
    %v1082 = vpop.permute.xlu0 %1081
    %1083 = vrot.lane.b32.xlu0 %v1069, 16
    %v1084 = vpop.permute.xlu0 %1083
    %1085 = vrot.lane.b32.xlu0 %v1072, 16
    %v1086 = vpop.permute.xlu0 %1085
    %vm1091 = vcmask 195712
    %1092 = vst.msk [vmem:[#allocation4] sm:$0xff] %vm1091, %v1080
    %1093 = vst.msk [vmem:[#allocation4 + $0x8] sm:$0xff] %vm1091, %v1082
    %1094 = vst.msk [vmem:[#allocation4 + $0x10] sm:$0xff] %vm1091, %v1084
    %1095 = vst.msk [vmem:[#allocation4 + $0x18] sm:$0xff] %vm1091, %v1086
    %1096 = vrot.lane.b32.xlu0 %v290, 104
    %v1097 = vpop.permute.xlu0 %1096
    %1098 = vrot.lane.b32.xlu0 %v545, 104
    %v1099 = vpop.permute.xlu0 %1098
    %v1101 = vsel %vm296, %v1097, 0
    %v1104 = vsel %vm296, %v1099, 0
    %1106 = vmatprep.subr.bf16.mxu0 0
    %1107 = vmatpush1.bf16.xpose.msra.mxu0 0
    %1108 = vmatprep.subr.bf16.mxu0 0
    %1109 = vmatpush1.bf16.xpose.msra.mxu0 0
    %1110 = vmatprep.subr.bf16.mxu0 0
    %1111 = vmatpush1.bf16.xpose.msra.mxu0 0
    %1112 = vmatprep.subr.bf16.mxu0 0
    %1113 = vmatpush1.bf16.xpose.msra.mxu0 0
    %1114 = vmatprep.subr.bf16.mxu0 0
    %1115 = vmatpush1.bf16.xpose.msra.mxu0 0
    %1116 = vmatprep.subr.bf16.mxu0 0
    %1117 = vmatpush1.bf16.xpose.msra.mxu0 0
    %1118 = vmatprep.subr.bf16.mxu0 0
    %1119 = vmatpush1.bf16.xpose.msra.mxu0 0
    %1120 = vmatprep.subr.bf16.mxu0 0
    %1121 = vmatpush1.bf16.xpose.msra.mxu0 %v1104
    %1122 = vmatprep.subr.bf16.mxu0 0
    %1123 = vmatpush2.bf16.xpose.msra.mxu0 0
    %1124 = vmatprep.subr.bf16.mxu0 0
    %1125 = vmatpush2.bf16.xpose.msra.mxu0 0
    %1126 = vmatprep.subr.bf16.mxu0 0
    %1127 = vmatpush2.bf16.xpose.msra.mxu0 0
    %1128 = vmatprep.subr.bf16.mxu0 0
    %1129 = vmatpush2.bf16.xpose.msra.mxu0 0
    %1130 = vmatprep.subr.bf16.mxu0 0
    %1131 = vmatpush2.bf16.xpose.msra.mxu0 0
    %1132 = vmatprep.subr.bf16.mxu0 0
    %1133 = vmatpush2.bf16.xpose.msra.mxu0 0
    %1134 = vmatprep.subr.bf16.mxu0 0
    %1135 = vmatpush2.bf16.xpose.msra.mxu0 0
    %1136 = vmatprep.subr.bf16.mxu0 0
    %1137 = vmatpush2.bf16.xpose.msra.mxu0 0
    %1138 = vmatprep.mubr.bf16.mxu0 0
    %1139 = vmatmul.mubr.bf16.gmra.mxu0 %v1101
    %v1140 = vpop.f32.mrf.mxu0
    %v1141 = vadd.f32 0.0, %v1140
    %v1142 = vpop.f32.mrf.mxu0
    %v1143 = vpop.f32.mrf.mxu0
    %v1144 = vadd.f32 0.0, %v1143
    %v1145 = vpop.f32.mrf.mxu0
    %1146 = vdwg.mxu0
    %1147 = vrot.lane.b32.xlu0 %v291, 104
    %v1148 = vpop.permute.xlu0 %1147
    %1149 = vrot.lane.b32.xlu0 %v600, 104
    %v1150 = vpop.permute.xlu0 %1149
    %v1152 = vsel %vm296, %v1148, 0
    %v1155 = vsel %vm296, %v1150, 0
    %1157 = vmatprep.subr.bf16.mxu0 0
    %1158 = vmatpush1.bf16.xpose.msra.mxu0 0
    %1159 = vmatprep.subr.bf16.mxu0 0
    %1160 = vmatpush1.bf16.xpose.msra.mxu0 0
    %1161 = vmatprep.subr.bf16.mxu0 0
    %1162 = vmatpush1.bf16.xpose.msra.mxu0 0
    %1163 = vmatprep.subr.bf16.mxu0 0
    %1164 = vmatpush1.bf16.xpose.msra.mxu0 0
    %1165 = vmatprep.subr.bf16.mxu0 0
    %1166 = vmatpush1.bf16.xpose.msra.mxu0 0
    %1167 = vmatprep.subr.bf16.mxu0 0
    %1168 = vmatpush1.bf16.xpose.msra.mxu0 0
    %1169 = vmatprep.subr.bf16.mxu0 0
    %1170 = vmatpush1.bf16.xpose.msra.mxu0 0
    %1171 = vmatprep.subr.bf16.mxu0 0
    %1172 = vmatpush1.bf16.xpose.msra.mxu0 %v1155
    %1173 = vmatprep.subr.bf16.mxu0 0
    %1174 = vmatpush2.bf16.xpose.msra.mxu0 0
    %1175 = vmatprep.subr.bf16.mxu0 0
    %1176 = vmatpush2.bf16.xpose.msra.mxu0 0
    %1177 = vmatprep.subr.bf16.mxu0 0
    %1178 = vmatpush2.bf16.xpose.msra.mxu0 0
    %1179 = vmatprep.subr.bf16.mxu0 0
    %1180 = vmatpush2.bf16.xpose.msra.mxu0 0
    %1181 = vmatprep.subr.bf16.mxu0 0
    %1182 = vmatpush2.bf16.xpose.msra.mxu0 0
    %1183 = vmatprep.subr.bf16.mxu0 0
    %1184 = vmatpush2.bf16.xpose.msra.mxu0 0
    %1185 = vmatprep.subr.bf16.mxu0 0
    %1186 = vmatpush2.bf16.xpose.msra.mxu0 0
    %1187 = vmatprep.subr.bf16.mxu0 0
    %1188 = vmatpush2.bf16.xpose.msra.mxu0 0
    %1189 = vmatprep.mubr.bf16.mxu0 0
    %1190 = vmatmul.mubr.bf16.gmra.mxu0 %v1152
    %v1191 = vpop.f32.mrf.mxu0
    %v1192 = vadd.f32 0.0, %v1191
    %v1193 = vpop.f32.mrf.mxu0
    %v1194 = vpop.f32.mrf.mxu0
    %v1195 = vadd.f32 0.0, %v1194
    %v1196 = vpop.f32.mrf.mxu0
    %1197 = vdwg.mxu0
    %v1198 = vmul.f32 %v1141, 0.35355338
    %v1199 = vmul.f32 %v1144, 0.35355338
    %v1200 = vmul.f32 %v1192, 0.35355338
    %v1201 = vmul.f32 %v1195, 0.35355338
    %v1202 = vsel %vm296, %v1198, -inf
    %1203 = vmax.xlane.f32.xlu0 %v1202
    %v1204 = vpop.xlane.xlu0 %1203
    %v1205 = vsel %vm296, %v1199, -inf
    %1206 = vmax.xlane.f32.xlu0 %v1205
    %v1207 = vpop.xlane.xlu0 %1206
    %v1208 = vsel %vm296, %v1200, -inf
    %1209 = vmax.xlane.f32.xlu0 %v1208
    %v1210 = vpop.xlane.xlu0 %1209
    %v1211 = vsel %vm296, %v1201, -inf
    %1212 = vmax.xlane.f32.xlu0 %v1211
    %v1213 = vpop.xlane.xlu0 %1212
    %v1214 = vsub.f32 %v1198, %v1204
    %v1215 = vsub.f32 %v1199, %v1207
    %v1216 = vsub.f32 %v1200, %v1210
    %v1217 = vsub.f32 %v1201, %v1213
    %v1218 = vmul.f32 %v1214, 1.442695
    %v1219 = vpow.pop %v1218
    %v1220 = vmul.f32 %v1215, 1.442695
    %v1221 = vpow.pop %v1220
    %v1222 = vmul.f32 %v1216, 1.442695
    %v1223 = vpow.pop %v1222
    %v1224 = vmul.f32 %v1217, 1.442695
    %v1225 = vpow.pop %v1224
    %v1226 = vsel %vm296, %v1219, 0.0
    %1227 = vadd.xlane.f32.xlu0 %v1226
    %v1228 = vpop.xlane.xlu0 %1227
    %v1229 = vsel %vm296, %v1221, 0.0
    %1230 = vadd.xlane.f32.xlu0 %v1229
    %v1231 = vpop.xlane.xlu0 %1230
    %v1232 = vsel %vm296, %v1223, 0.0
    %1233 = vadd.xlane.f32.xlu0 %v1232
    %v1234 = vpop.xlane.xlu0 %1233
    %v1235 = vsel %vm296, %v1225, 0.0
    %1236 = vadd.xlane.f32.xlu0 %v1235
    %v1237 = vpop.xlane.xlu0 %1236
    %v1238 = vrcp.pop %v1228
    %v1239 = vrcp.pop %v1231
    %v1240 = vrcp.pop %v1234
    %v1241 = vrcp.pop %v1237
    %v1242 = vmul.f32 %v1219, %v1238
    %v1243 = vmul.f32 %v1221, %v1239
    %v1244 = vmul.f32 %v1223, %v1240
    %v1245 = vmul.f32 %v1225, %v1241
    %v1246 = vpack.c.bf16 %v1243, %v1242
    %v1247 = vpack.c.bf16 %v1245, %v1244
    %1248 = vrot.lane.b32.xlu0 %v702, 104
    %v1249 = vpop.permute.xlu0 %1248
    %v1251 = vsel %vm296, %v1246, 0
    %v1254 = vsel %vm444, %v1249, 0
    %1256 = vmatprep.subr.bf16.mxu0 0
    %1257 = vmatpush1.bf16.msra.mxu0 0
    %1258 = vmatprep.subr.bf16.mxu0 0
    %1259 = vmatpush1.bf16.msra.mxu0 0
    %1260 = vmatprep.subr.bf16.mxu0 0
    %1261 = vmatpush1.bf16.msra.mxu0 0
    %1262 = vmatprep.subr.bf16.mxu0 0
    %1263 = vmatpush1.bf16.msra.mxu0 0
    %1264 = vmatprep.subr.bf16.mxu0 0
    %1265 = vmatpush1.bf16.msra.mxu0 0
    %1266 = vmatprep.subr.bf16.mxu0 0
    %1267 = vmatpush1.bf16.msra.mxu0 0
    %1268 = vmatprep.subr.bf16.mxu0 0
    %1269 = vmatpush1.bf16.msra.mxu0 0
    %1270 = vmatprep.subr.bf16.mxu0 0
    %1271 = vmatpush1.bf16.msra.mxu0 %v1254
    %1272 = vmatprep.subr.bf16.mxu0 0
    %1273 = vmatpush2.bf16.msra.mxu0 0
    %1274 = vmatprep.subr.bf16.mxu0 0
    %1275 = vmatpush2.bf16.msra.mxu0 0
    %1276 = vmatprep.subr.bf16.mxu0 0
    %1277 = vmatpush2.bf16.msra.mxu0 0
    %1278 = vmatprep.subr.bf16.mxu0 0
    %1279 = vmatpush2.bf16.msra.mxu0 0
    %1280 = vmatprep.subr.bf16.mxu0 0
    %1281 = vmatpush2.bf16.msra.mxu0 0
    %1282 = vmatprep.subr.bf16.mxu0 0
    %1283 = vmatpush2.bf16.msra.mxu0 0
    %1284 = vmatprep.subr.bf16.mxu0 0
    %1285 = vmatpush2.bf16.msra.mxu0 0
    %1286 = vmatprep.subr.bf16.mxu0 0
    %1287 = vmatpush2.bf16.msra.mxu0 0
    %1288 = vmatprep.mubr.bf16.mxu0 0
    %1289 = vmatmul.mubr.bf16.gmra.mxu0 %v1251
    %v1290 = vpop.f32.mrf.mxu0
    %v1291 = vadd.f32 0.0, %v1290
    %v1292 = vpop.f32.mrf.mxu0
    %v1293 = vpop.f32.mrf.mxu0
    %v1294 = vadd.f32 0.0, %v1293
    %v1295 = vpop.f32.mrf.mxu0
    %1296 = vdwg.mxu0
    %1297 = vrot.lane.b32.xlu0 %v754, 104
    %v1298 = vpop.permute.xlu0 %1297
    %v1300 = vsel %vm296, %v1247, 0
    %v1303 = vsel %vm444, %v1298, 0
    %1305 = vmatprep.subr.bf16.mxu0 0
    %1306 = vmatpush1.bf16.msra.mxu0 0
    %1307 = vmatprep.subr.bf16.mxu0 0
    %1308 = vmatpush1.bf16.msra.mxu0 0
    %1309 = vmatprep.subr.bf16.mxu0 0
    %1310 = vmatpush1.bf16.msra.mxu0 0
    %1311 = vmatprep.subr.bf16.mxu0 0
    %1312 = vmatpush1.bf16.msra.mxu0 0
    %1313 = vmatprep.subr.bf16.mxu0 0
    %1314 = vmatpush1.bf16.msra.mxu0 0
    %1315 = vmatprep.subr.bf16.mxu0 0
    %1316 = vmatpush1.bf16.msra.mxu0 0
    %1317 = vmatprep.subr.bf16.mxu0 0
    %1318 = vmatpush1.bf16.msra.mxu0 0
    %1319 = vmatprep.subr.bf16.mxu0 0
    %1320 = vmatpush1.bf16.msra.mxu0 %v1303
    %1321 = vmatprep.subr.bf16.mxu0 0
    %1322 = vmatpush2.bf16.msra.mxu0 0
    %1323 = vmatprep.subr.bf16.mxu0 0
    %1324 = vmatpush2.bf16.msra.mxu0 0
    %1325 = vmatprep.subr.bf16.mxu0 0
    %1326 = vmatpush2.bf16.msra.mxu0 0
    %1327 = vmatprep.subr.bf16.mxu0 0
    %1328 = vmatpush2.bf16.msra.mxu0 0
    %1329 = vmatprep.subr.bf16.mxu0 0
    %1330 = vmatpush2.bf16.msra.mxu0 0
    %1331 = vmatprep.subr.bf16.mxu0 0
    %1332 = vmatpush2.bf16.msra.mxu0 0
    %1333 = vmatprep.subr.bf16.mxu0 0
    %1334 = vmatpush2.bf16.msra.mxu0 0
    %1335 = vmatprep.subr.bf16.mxu0 0
    %1336 = vmatpush2.bf16.msra.mxu0 0
    %1337 = vmatprep.mubr.bf16.mxu0 0
    %1338 = vmatmul.mubr.bf16.gmra.mxu0 %v1300
    %v1339 = vpop.f32.mrf.mxu0
    %v1340 = vadd.f32 0.0, %v1339
    %v1341 = vpop.f32.mrf.mxu0
    %v1342 = vpop.f32.mrf.mxu0
    %v1343 = vadd.f32 0.0, %v1342
    %v1344 = vpop.f32.mrf.mxu0
    %1345 = vdwg.mxu0
    %1350 = vrot.lane.b32.xlu0 %v1291, 24
    %v1351 = vpop.permute.xlu0 %1350
    %1352 = vrot.lane.b32.xlu0 %v1294, 24
    %v1353 = vpop.permute.xlu0 %1352
    %1354 = vrot.lane.b32.xlu0 %v1340, 24
    %v1355 = vpop.permute.xlu0 %1354
    %1356 = vrot.lane.b32.xlu0 %v1343, 24
    %v1357 = vpop.permute.xlu0 %1356
    %vm1362 = vcmask 261312
    %1363 = vst.msk [vmem:[#allocation4] sm:$0xff] %vm1362, %v1351
    %1364 = vst.msk [vmem:[#allocation4 + $0x8] sm:$0xff] %vm1362, %v1353
    %1365 = vst.msk [vmem:[#allocation4 + $0x10] sm:$0xff] %vm1362, %v1355
    %1366 = vst.msk [vmem:[#allocation4 + $0x18] sm:$0xff] %vm1362, %v1357
    %v1367 = vld [vmem:[#allocation4] sm:$0xff]
    %v1368 = vld [vmem:[#allocation4 + $0x8] sm:$0xff]
    %v1369 = vld [vmem:[#allocation4 + $0x10] sm:$0xff]
    %v1370 = vld [vmem:[#allocation4 + $0x18] sm:$0xff]
    %v1371 = vpack.c.bf16 %v1368, %v1367
    %v1372 = vpack.c.bf16 %v1370, %v1369
    %v1373 = vld [vmem:[#allocation13] sm:$0xf]
    %v1374 = vld [vmem:[#allocation13 + $0x4] sm:$0xf]
    %v1375 = vld [vmem:[#allocation13 + $0x8] sm:$0xf]
    %v1376 = vld [vmem:[#allocation13 + $0xc] sm:$0xf]
    %v1377 = vld [vmem:[%s7] sm:$0x1]
    %v1379 = vlaneseq
    %v1380 = vshrl.u32 %v1379, 7
    %v1381 = vsub.s32 0, %v1380
    %v1382 = vrot.slane %v1377, %v1381
    %v1388 = vunpack.c.l.b16 %v1373
    %v1389 = vunpack.c.l.b16 %v1374
    %v1390 = vunpack.c.l.b16 %v1375
    %v1391 = vunpack.c.l.b16 %v1376
    %v1392 = vpack.c.b16 %v1389, %v1388
    %v1393 = vpack.c.b16 %v1391, %v1390
    %v1397 = vsel %vm234, %v1371, 0
    %v1400 = vsel %vm234, %v1372, 0
    %1402 = vmatprep.subr.bf16.mxu0 0
    %1403 = vmatpush1.bf16.msra.mxu0 0
    %1404 = vmatprep.subr.bf16.mxu0 0
    %1405 = vmatpush1.bf16.msra.mxu0 0
    %1406 = vmatprep.subr.bf16.mxu0 0
    %1407 = vmatpush1.bf16.msra.mxu0 0
    %1408 = vmatprep.subr.bf16.mxu0 0
    %1409 = vmatpush1.bf16.msra.mxu0 0
    %1410 = vmatprep.subr.bf16.mxu0 0
    %1411 = vmatpush1.bf16.msra.mxu0 0
    %1412 = vmatprep.subr.bf16.mxu0 0
    %1413 = vmatpush1.bf16.msra.mxu0 0
    %1414 = vmatprep.subr.bf16.mxu0 0
    %1415 = vmatpush1.bf16.msra.mxu0 %v1393
    %1416 = vmatprep.subr.bf16.mxu0 0
    %1417 = vmatpush1.bf16.msra.mxu0 %v1392
    %1418 = vmatprep.subr.bf16.mxu0 0
    %1419 = vmatpush2.bf16.msra.mxu0 0
    %1420 = vmatprep.subr.bf16.mxu0 0
    %1421 = vmatpush2.bf16.msra.mxu0 0
    %1422 = vmatprep.subr.bf16.mxu0 0
    %1423 = vmatpush2.bf16.msra.mxu0 0
    %1424 = vmatprep.subr.bf16.mxu0 0
    %1425 = vmatpush2.bf16.msra.mxu0 0
    %1426 = vmatprep.subr.bf16.mxu0 0
    %1427 = vmatpush2.bf16.msra.mxu0 0
    %1428 = vmatprep.subr.bf16.mxu0 0
    %1429 = vmatpush2.bf16.msra.mxu0 0
    %1430 = vmatprep.subr.bf16.mxu0 0
    %1431 = vmatpush2.bf16.msra.mxu0 0
    %1432 = vmatprep.subr.bf16.mxu0 0
    %1433 = vmatpush2.bf16.msra.mxu0 0
    %1434 = vmatprep.mubr.bf16.mxu0 0
    %1435 = vmatmul.mubr.bf16.gmra.mxu0 %v1397
    %v1436 = vpop.f32.mrf.mxu0
    %v1437 = vadd.f32 %v1382, %v1436
    %v1438 = vpop.f32.mrf.mxu0
    %v1439 = vpop.f32.mrf.mxu0
    %v1440 = vadd.f32 %v1382, %v1439
    %v1441 = vpop.f32.mrf.mxu0
    %1442 = vmatprep.mubr.bf16.mxu0 0
    %1443 = vmatmul.mubr.bf16.gmra.mxu0 %v1400
    %v1444 = vpop.f32.mrf.mxu0
    %v1445 = vadd.f32 %v1382, %v1444
    %v1446 = vpop.f32.mrf.mxu0
    %v1447 = vpop.f32.mrf.mxu0
    %v1448 = vadd.f32 %v1382, %v1447
    %v1449 = vpop.f32.mrf.mxu0
    %1450 = vdwg.mxu0
    %v1451 = vadd.f32 %v205, %v1437
    %v1452 = vadd.f32 %v206, %v1440
    %v1453 = vadd.f32 %v207, %v1445
    %v1454 = vadd.f32 %v208, %v1448
    %v1455 = vadd.f32 %v276, %v1437
    %v1456 = vadd.f32 %v279, %v1440
    %v1457 = vadd.f32 %v284, %v1445
    %v1458 = vadd.f32 %v287, %v1448
    %v1459 = vld [vmem:[%s8] sm:$0x1]
    %v1460 = vld [vmem:[%s9] sm:$0x1]
    %1465 = vrot.lane.b32.xlu0 %v1455, 96
    %v1466 = vpop.permute.xlu0 %1465
    %1467 = vrot.lane.b32.xlu0 %v1456, 96
    %v1468 = vpop.permute.xlu0 %1467
    %1469 = vrot.lane.b32.xlu0 %v1457, 96
    %v1470 = vpop.permute.xlu0 %1469
    %1471 = vrot.lane.b32.xlu0 %v1458, 96
    %v1472 = vpop.permute.xlu0 %1471
    %v1477 = vsel %vm234, %v1466, 0.0
    %1478 = vadd.xlane.f32.xlu0 %v1477
    %v1479 = vpop.xlane.xlu0 %1478
    %v1480 = vsel %vm234, %v1468, 0.0
    %1481 = vadd.xlane.f32.xlu0 %v1480
    %v1482 = vpop.xlane.xlu0 %1481
    %v1483 = vsel %vm234, %v1470, 0.0
    %1484 = vadd.xlane.f32.xlu0 %v1483
    %v1485 = vpop.xlane.xlu0 %1484
    %v1486 = vsel %vm234, %v1472, 0.0
    %1487 = vadd.xlane.f32.xlu0 %v1486
    %v1488 = vpop.xlane.xlu0 %1487
    %v1489 = vrcp.pop 32.0
    %v1490 = vmul.f32 %v1479, %v1489
    %v1491 = vmul.f32 %v1482, %v1489
    %v1492 = vmul.f32 %v1485, %v1489
    %v1493 = vmul.f32 %v1488, %v1489
    %v1494 = vsub.f32 %v1455, %v1490
    %v1495 = vsub.f32 %v1456, %v1491
    %v1496 = vsub.f32 %v1457, %v1492
    %v1497 = vsub.f32 %v1458, %v1493
    %v1498 = vmul.f32 %v1494, %v1494
    %v1499 = vmul.f32 %v1495, %v1495
    %v1500 = vmul.f32 %v1496, %v1496
    %v1501 = vmul.f32 %v1497, %v1497
    %1506 = vrot.lane.b32.xlu0 %v1498, 96
    %v1507 = vpop.permute.xlu0 %1506
    %1508 = vrot.lane.b32.xlu0 %v1499, 96
    %v1509 = vpop.permute.xlu0 %1508
    %1510 = vrot.lane.b32.xlu0 %v1500, 96
    %v1511 = vpop.permute.xlu0 %1510
    %1512 = vrot.lane.b32.xlu0 %v1501, 96
    %v1513 = vpop.permute.xlu0 %1512
    %v1518 = vsel %vm234, %v1507, 0.0
    %1519 = vadd.xlane.f32.xlu0 %v1518
    %v1520 = vpop.xlane.xlu0 %1519
    %v1521 = vsel %vm234, %v1509, 0.0
    %1522 = vadd.xlane.f32.xlu0 %v1521
    %v1523 = vpop.xlane.xlu0 %1522
    %v1524 = vsel %vm234, %v1511, 0.0
    %1525 = vadd.xlane.f32.xlu0 %v1524
    %v1526 = vpop.xlane.xlu0 %1525
    %v1527 = vsel %vm234, %v1513, 0.0
    %1528 = vadd.xlane.f32.xlu0 %v1527
    %v1529 = vpop.xlane.xlu0 %1528
    %v1530 = vmul.f32 %v1520, %v1489
    %v1531 = vmul.f32 %v1523, %v1489
    %v1532 = vmul.f32 %v1526, %v1489
    %v1533 = vmul.f32 %v1529, %v1489
    %v1534 = vadd.f32 %v1530, 1e-05
    %v1535 = vadd.f32 %v1531, 1e-05
    %v1536 = vadd.f32 %v1532, 1e-05
    %v1537 = vadd.f32 %v1533, 1e-05
    %v1538 = vrsqrt.pop %v1534
    %v1539 = vrsqrt.pop %v1535
    %v1540 = vrsqrt.pop %v1536
    %v1541 = vrsqrt.pop %v1537
    %v1542 = vmul.f32 %v1494, %v1538
    %v1543 = vmul.f32 %v1495, %v1539
    %v1544 = vmul.f32 %v1496, %v1540
    %v1545 = vmul.f32 %v1497, %v1541
    %v1547 = vlaneseq
    %v1548 = vshrl.u32 %v1547, 7
    %v1549 = vsub.s32 0, %v1548
    %v1550 = vrot.slane %v1459, %v1549
    %1551 = vrot.lane.b32.xlu0 %v1550, 32
    %v1552 = vpop.permute.xlu0 %1551
    %v1554 = vmul.f32 %v1542, %v1552
    %v1555 = vmul.f32 %v1543, %v1552
    %v1556 = vmul.f32 %v1544, %v1552
    %v1557 = vmul.f32 %v1545, %v1552
    %v1559 = vlaneseq
    %v1560 = vshrl.u32 %v1559, 7
    %v1561 = vsub.s32 0, %v1560
    %v1562 = vrot.slane %v1460, %v1561
    %1563 = vrot.lane.b32.xlu0 %v1562, 32
    %v1564 = vpop.permute.xlu0 %1563
    %v1566 = vadd.f32 %v1554, %v1564
    %v1567 = vadd.f32 %v1555, %v1564
    %v1568 = vadd.f32 %v1556, %v1564
    %v1569 = vadd.f32 %v1557, %v1564
    %v1570 = vxor.u32 %v1566, 2147483648
    %v1571 = vxor.u32 %v1567, 2147483648
    %v1572 = vxor.u32 %v1568, 2147483648
    %v1573 = vxor.u32 %v1569, 2147483648
    %v1574 = vmul.f32 %v1570, 1.442695
    %v1575 = vpow.pop %v1574
    %v1576 = vmul.f32 %v1571, 1.442695
    %v1577 = vpow.pop %v1576
    %v1578 = vmul.f32 %v1572, 1.442695
    %v1579 = vpow.pop %v1578
    %v1580 = vmul.f32 %v1573, 1.442695
    %v1581 = vpow.pop %v1580
    %v1582 = vadd.f32 %v1575, 1.0
    %v1583 = vadd.f32 %v1577, 1.0
    %v1584 = vadd.f32 %v1579, 1.0
    %v1585 = vadd.f32 %v1581, 1.0
    %v1586 = vrcp.pop %v1582
    %v1587 = vmul.f32 1.0, %v1586
    %v1588 = vrcp.pop %v1583
    %v1589 = vmul.f32 1.0, %v1588
    %v1590 = vrcp.pop %v1584
    %v1591 = vmul.f32 1.0, %v1590
    %v1592 = vrcp.pop %v1585
    %v1593 = vmul.f32 1.0, %v1592
    %1598 = vrot.lane.b32.xlu0 %v1451, 32
    %v1599 = vpop.permute.xlu0 %1598
    %1600 = vrot.lane.b32.xlu0 %v1452, 32
    %v1601 = vpop.permute.xlu0 %1600
    %1602 = vrot.lane.b32.xlu0 %v1453, 32
    %v1603 = vpop.permute.xlu0 %1602
    %1604 = vrot.lane.b32.xlu0 %v1454, 32
    %v1605 = vpop.permute.xlu0 %1604
    %v1610 = vmul.f32 %v1587, %v1599
    %v1611 = vmul.f32 %v1589, %v1601
    %v1612 = vmul.f32 %v1591, %v1603
    %v1613 = vmul.f32 %v1593, %v1605
    %1618 = vrot.lane.b32.xlu0 %v1610, 96
    %v1619 = vpop.permute.xlu0 %1618
    %1620 = vrot.lane.b32.xlu0 %v1611, 96
    %v1621 = vpop.permute.xlu0 %1620
    %1622 = vrot.lane.b32.xlu0 %v1612, 96
    %v1623 = vpop.permute.xlu0 %1622
    %1624 = vrot.lane.b32.xlu0 %v1613, 96
    %v1625 = vpop.permute.xlu0 %1624
    %v1630 = vadd.f32 %v205, %v1619
    %v1631 = vadd.f32 %v206, %v1621
    %v1632 = vadd.f32 %v207, %v1623
    %v1633 = vadd.f32 %v208, %v1625
    %v1634 = vld [vmem:[%s10] sm:$0x1]
    %v1635 = vld [vmem:[%s11] sm:$0x1]
    %v1636 = vsel %vm234, %v1630, 0.0
    %1637 = vadd.xlane.f32.xlu0 %v1636
    %v1638 = vpop.xlane.xlu0 %1637
    %v1639 = vsel %vm234, %v1631, 0.0
    %1640 = vadd.xlane.f32.xlu0 %v1639
    %v1641 = vpop.xlane.xlu0 %1640
    %v1642 = vsel %vm234, %v1632, 0.0
    %1643 = vadd.xlane.f32.xlu0 %v1642
    %v1644 = vpop.xlane.xlu0 %1643
    %v1645 = vsel %vm234, %v1633, 0.0
    %1646 = vadd.xlane.f32.xlu0 %v1645
    %v1647 = vpop.xlane.xlu0 %1646
    %v1648 = vmul.f32 %v1638, %v1489
    %v1649 = vmul.f32 %v1641, %v1489
    %v1650 = vmul.f32 %v1644, %v1489
    %v1651 = vmul.f32 %v1647, %v1489
    %v1652 = vsub.f32 %v1630, %v1648
    %v1653 = vsub.f32 %v1631, %v1649
    %v1654 = vsub.f32 %v1632, %v1650
    %v1655 = vsub.f32 %v1633, %v1651
    %v1656 = vmul.f32 %v1652, %v1652
    %v1657 = vmul.f32 %v1653, %v1653
    %v1658 = vmul.f32 %v1654, %v1654
    %v1659 = vmul.f32 %v1655, %v1655
    %v1660 = vsel %vm234, %v1656, 0.0
    %1661 = vadd.xlane.f32.xlu0 %v1660
    %v1662 = vpop.xlane.xlu0 %1661
    %v1663 = vsel %vm234, %v1657, 0.0
    %1664 = vadd.xlane.f32.xlu0 %v1663
    %v1665 = vpop.xlane.xlu0 %1664
    %v1666 = vsel %vm234, %v1658, 0.0
    %1667 = vadd.xlane.f32.xlu0 %v1666
    %v1668 = vpop.xlane.xlu0 %1667
    %v1669 = vsel %vm234, %v1659, 0.0
    %1670 = vadd.xlane.f32.xlu0 %v1669
    %v1671 = vpop.xlane.xlu0 %1670
    %v1672 = vmul.f32 %v1662, %v1489
    %v1673 = vmul.f32 %v1665, %v1489
    %v1674 = vmul.f32 %v1668, %v1489
    %v1675 = vmul.f32 %v1671, %v1489
    %v1676 = vadd.f32 %v1672, 1e-05
    %v1677 = vadd.f32 %v1673, 1e-05
    %v1678 = vadd.f32 %v1674, 1e-05
    %v1679 = vadd.f32 %v1675, 1e-05
    %v1680 = vrsqrt.pop %v1676
    %v1681 = vrsqrt.pop %v1677
    %v1682 = vrsqrt.pop %v1678
    %v1683 = vrsqrt.pop %v1679
    %v1684 = vmul.f32 %v1652, %v1680
    %v1685 = vmul.f32 %v1653, %v1681
    %v1686 = vmul.f32 %v1654, %v1682
    %v1687 = vmul.f32 %v1655, %v1683
    %v1689 = vlaneseq
    %v1690 = vshrl.u32 %v1689, 7
    %v1691 = vsub.s32 0, %v1690
    %v1692 = vrot.slane %v1634, %v1691
    %v1694 = vmul.f32 %v1684, %v1692
    %v1695 = vmul.f32 %v1685, %v1692
    %v1696 = vmul.f32 %v1686, %v1692
    %v1697 = vmul.f32 %v1687, %v1692
    %v1699 = vlaneseq
    %v1700 = vshrl.u32 %v1699, 7
    %v1701 = vsub.s32 0, %v1700
    %v1702 = vrot.slane %v1635, %v1701
    %v1704 = vadd.f32 %v1694, %v1702
    %v1705 = vadd.f32 %v1695, %v1702
    %v1706 = vadd.f32 %v1696, %v1702
    %v1707 = vadd.f32 %v1697, %v1702
    %1708 = vst.msk [vmem:[#allocation14] sm:$0xff] %vm234, %v1704
    %1709 = vst.msk [vmem:[#allocation14 + $0x8] sm:$0xff] %vm234, %v1705
    %1710 = vst.msk [vmem:[#allocation14 + $0x10] sm:$0xff] %vm234, %v1706
    %1711 = vst.msk [vmem:[#allocation14 + $0x18] sm:$0xff] %vm234, %v1707
    // Predicated region
    $region74: #{tpu_custom_call.1} parent=1 // pred_check
      _
    $region75: #{tpu_custom_call.1} parent=1 // pred_check_branch
      %1713 = sbr.rel (0) target = $region77
    $region76: #{tpu_custom_call.1} parent=1 // pred_region
      %s1715 = ssub.s32 512, 512
      %1716 = vsyncadd [#allocation7], %s1715
      %s1717 = sshll.u32 [#allocation14], 4
      %s1718 = int_to_ptr.vmem [resolvable:$true] %s1717
      %1723 = dma.vmem_to_hbm [thread:$0]  %s1718, 512, %s12, [#allocation7], 128, 128, 8
    $region77: #{tpu_custom_call.1} parent=1 // pred_fallthru
      _
    // Predicated region
    $region78: #{tpu_custom_call.1} parent=1 // pred_check
      _
    $region79: #{tpu_custom_call.1} parent=1 // pred_check_branch
      %1725 = sbr.rel (0) target = $region81
    $region80: #{tpu_custom_call.1} parent=1 // pred_region
      %1726 = dma.done [#allocation7], 512
    $region81: #{tpu_custom_call.1} parent=1 // pred_fallthru
      _
    %1727 = vsyncpa [#allocation6], 1
    %1728 = vsyncpa [#allocation9], 1
    %1729 = vsyncpa [#allocation12], 1
    %1730 = vsyncpa [#allocation7], 1

</llo_original>
